<compile_context>
chip_gen: v7x
topology: tpu7x:2x2x1
jax: 0.10.0
libtpu: 0.0.40
codegen_flags: <defaults>
</compile_context>

<pallas_src>
import jax
import jax.numpy as jnp
from jax.experimental import pallas as pl
from jax.experimental.pallas import tpu as pltpu


def _mlp_kernel(x_ref, w0_ref, b0_ref, mu_ref, nis2_ref,
                w1_ref, b1_ref, w2_ref, b2_ref,
                wo_ref, bo_ref, o_ref):
    # Feature-major layout: x is (n_in, tile); activations are (features, tile).
    x = x_ref[...]                                  # (n_in, tile)
    w0 = w0_ref[...]                                # (H0, n_in)
    n_in = x.shape[0]

    # Layer 0: K (= n_input) is tiny -> broadcast multiply-adds on the VPU, skip the MXU.
    h = w0[:, 0:1] * x[0:1, :]                      # (H0,1)*(1,tile) -> (H0,tile)
    for k in range(1, n_in):                        # static Python loop, n_in is tiny
        h = h + w0[:, k:k + 1] * x[k:k + 1, :]
    h = h + b0_ref[...]                             # (H0,1) broadcast over lanes

    # Gaussian (RBF) modulation with precomputed -1/sigma^2 (multiply, no divide).
    d = h - mu_ref[...]
    h = h * jnp.exp(d * d * nis2_ref[...])

    # actv -> Linear1 : (H1,H0) @ (H0,tile)
    h = jnp.tanh(h)
    h = jnp.dot(w1_ref[...], h, preferred_element_type=jnp.float32) + b1_ref[...]

    # actv -> Linear2 : (H2,H1) @ (H1,tile)
    h = jnp.tanh(h)
    h = jnp.dot(w2_ref[...], h, preferred_element_type=jnp.float32) + b2_ref[...]

    # trailing actv -> fc_out : (n_out,H2) @ (H2,tile), lane-dense output store
    h = jnp.tanh(h)
    o_ref[...] = jnp.dot(wo_ref[...], h, preferred_element_type=jnp.float32) + bo_ref[...]


def _round_up(v, m):
    return ((v + m - 1) // m) * m


def _num_tensorcores_per_chip():
    """2 on dual-TC chips (v7x), else 1. Defensive: falls back to 1."""
    try:
        kind = jax.devices()[0].device_kind.lower()
    except Exception:
        return 1
    return 2 if ("v7" in kind or "7x" in kind) else 1


def custom_nn_forward(x, params, *, max_batch_tile=4096):
    """x: (B, n_input) f32. params: PyTorch-layout weights (out,in), column vectors (out,1).

    Returns (B, n_output) f32, matching the PyTorch forward.
    """
    B, n_in = x.shape
    n_out = params["wo"].shape[0]

    # Generation-aware tiling: one grid step on single-TC chips, num_cores steps on v7x.
    num_cores = _num_tensorcores_per_chip()
    padded_b = _round_up(B, 128)                     # lane-dense batch axis
    tile = _round_up(pl.cdiv(padded_b, num_cores), 128)
    tile = min(tile, _round_up(max_batch_tile, 128))
    padded_b = _round_up(padded_b, tile)
    grid = padded_b // tile

    # Layout plumbing: transpose to feature-major and pad the batch (lane) axis once.
    xt = x.T                                         # (n_in, B)
    if padded_b != B:
        xt = jnp.pad(xt, ((0, 0), (0, padded_b - B)))

    # Parameters are tiny (<10 KB total); pass them whole.
    def full(arr):
        return pl.BlockSpec(arr.shape, lambda i: (0, 0))

    grid_spec = pltpu.PrefetchScalarGridSpec(
        num_scalar_prefetch=0,
        grid=(grid,),
        in_specs=[
            pl.BlockSpec((n_in, tile), lambda i: (0, i)),
            full(params["w0"]), full(params["b0"]),
            full(params["mu"]), full(params["neg_inv_sigma_sq"]),
            full(params["w1"]), full(params["b1"]),
            full(params["w2"]), full(params["b2"]),
            full(params["wo"]), full(params["bo"]),
        ],
        out_specs=pl.BlockSpec((n_out, tile), lambda i: (0, i)),
    )

    out_t = pl.pallas_call(
        _mlp_kernel,
        out_shape=jax.ShapeDtypeStruct((n_out, padded_b), jnp.float32),
        grid_spec=grid_spec,
        compiler_params=pltpu.CompilerParams(
            dimension_semantics=("parallel",)),
    )(xt, params["w0"], params["b0"], params["mu"], params["neg_inv_sigma_sq"],
      params["w1"], params["b1"], params["w2"], params["b2"],
      params["wo"], params["bo"])

    # Single slice + transpose back to the PyTorch (B, n_out) layout.
    return out_t[:, :B].T


def _reference_forward(x, p):
    """Pure-JAX reference in the original (batch, feature) math."""
    h = x @ p["w0"].T + p["b0"][:, 0]
    mu = p["mu"][:, 0]
    sigma = p["sigma"][:, 0]
    h = h * jnp.exp(-((h - mu) ** 2) / (sigma ** 2))
    h = jnp.tanh(h)
    h = h @ p["w1"].T + p["b1"][:, 0]
    h = jnp.tanh(h)
    h = h @ p["w2"].T + p["b2"][:, 0]
    h = jnp.tanh(h)
    return h @ p["wo"].T + p["bo"][:, 0]


def init_params(key, n_input, hidden_units, n_output):
    """Deterministic synthetic init. Weights in PyTorch (out, in) layout, vectors as (out, 1)."""
    assert len(hidden_units) == 3, "script is specialized to 3 hidden layers"
    ks = jax.random.split(key, 8)

    def lin(k_w, k_b, fan_in, fan_out):
        bound = 1.0 / jnp.sqrt(fan_in)
        w = jax.random.uniform(k_w, (fan_out, fan_in), jnp.float32, -bound, bound)
        b = jax.random.uniform(k_b, (fan_out, 1), jnp.float32, -bound, bound)
        return w, b

    h0, h1, h2 = hidden_units
    w0, b0 = lin(ks[0], ks[1], n_input, h0)
    w1, b1 = lin(ks[2], ks[3], h0, h1)
    w2, b2 = lin(ks[4], ks[5], h1, h2)
    wo, bo = lin(ks[6], ks[7], h2, n_output)

    sigma = jnp.ones((h0, 1), jnp.float32) * 0.1
    return {
        "w0": w0, "b0": b0,
        "mu": jnp.linspace(0.0, 2.0, h0, dtype=jnp.float32).reshape(h0, 1),
        "sigma": sigma,                                   # kept for the reference
        "neg_inv_sigma_sq": -1.0 / (sigma * sigma),       # folded constant used in-kernel
        "w1": w1, "b1": b1,
        "w2": w2, "b2": b2,
        "wo": wo, "bo": bo,
    }


if __name__ == "__main__":
    key = jax.random.PRNGKey(0)
    k_x, k_p = jax.random.split(key)

    n_input = 2
    hidden_units = [32, 32, 32]
    n_output = 4
    batch = 1000  # not a multiple of 128 -> exercises the pad path (padded to 1024)

    x = jax.random.normal(k_x, (batch, n_input), dtype=jnp.float32)
    params = init_params(k_p, n_input, hidden_units, n_output)

    out = custom_nn_forward(x, params)
    out = jax.block_until_ready(out)

    ref = _reference_forward(x, params)
    assert out.shape == (batch, n_output)
    assert jnp.allclose(out, ref, atol=1e-5, rtol=1e-5), "mismatch vs JAX reference"

    print("KERNEL_OK")
</pallas_src>

<mosaic_0001>
module attributes {stable_mosaic.version = 11 : i64} {
  func.func @_mlp_kernel(%arg0: i32, %arg1: memref<2x1024xf32, #tpu.memory_space<vmem>>, %arg2: memref<32x2xf32, #tpu.memory_space<vmem>>, %arg3: memref<32x1xf32, #tpu.memory_space<vmem>>, %arg4: memref<32x1xf32, #tpu.memory_space<vmem>>, %arg5: memref<32x1xf32, #tpu.memory_space<vmem>>, %arg6: memref<32x32xf32, #tpu.memory_space<vmem>>, %arg7: memref<32x1xf32, #tpu.memory_space<vmem>>, %arg8: memref<32x32xf32, #tpu.memory_space<vmem>>, %arg9: memref<32x1xf32, #tpu.memory_space<vmem>>, %arg10: memref<4x32xf32, #tpu.memory_space<vmem>>, %arg11: memref<4x1xf32, #tpu.memory_space<vmem>>, %arg12: memref<4x1024xf32, #tpu.memory_space<vmem>>) attributes {dimension_semantics = [#tpu.dimension_semantics<parallel>], iteration_bounds = array<i64: 1>, scalar_prefetch = 0 : i64, scratch_operands = 0 : i64, tpu.core_type = #tpu.core_type<tc>, window_params = [{transform_indices = @transform_0, window_bounds = array<i64: 2, 1024>}, {pipeline_mode = #tpu.pipeline_mode<synchronous>, transform_indices = @transform_1, window_bounds = array<i64: 32, 2>}, {pipeline_mode = #tpu.pipeline_mode<synchronous>, transform_indices = @transform_2, window_bounds = array<i64: 32, 1>}, {pipeline_mode = #tpu.pipeline_mode<synchronous>, transform_indices = @transform_3, window_bounds = array<i64: 32, 1>}, {pipeline_mode = #tpu.pipeline_mode<synchronous>, transform_indices = @transform_4, window_bounds = array<i64: 32, 1>}, {pipeline_mode = #tpu.pipeline_mode<synchronous>, transform_indices = @transform_5, window_bounds = array<i64: 32, 32>}, {pipeline_mode = #tpu.pipeline_mode<synchronous>, transform_indices = @transform_6, window_bounds = array<i64: 32, 1>}, {pipeline_mode = #tpu.pipeline_mode<synchronous>, transform_indices = @transform_7, window_bounds = array<i64: 32, 32>}, {pipeline_mode = #tpu.pipeline_mode<synchronous>, transform_indices = @transform_8, window_bounds = array<i64: 32, 1>}, {pipeline_mode = #tpu.pipeline_mode<synchronous>, transform_indices = @transform_9, window_bounds = array<i64: 4, 32>}, {pipeline_mode = #tpu.pipeline_mode<synchronous>, transform_indices = @transform_10, window_bounds = array<i64: 4, 1>}, {transform_indices = @transform_11, window_bounds = array<i64: 4, 1024>}]} {
    %c0 = arith.constant 0 : index
    %c0_0 = arith.constant 0 : index
    %0 = vector.load %arg1[%c0, %c0_0] : memref<2x1024xf32, #tpu.memory_space<vmem>>, vector<2x1024xf32>
    %c0_1 = arith.constant 0 : index
    %c0_2 = arith.constant 0 : index
    %1 = vector.load %arg2[%c0_1, %c0_2] : memref<32x2xf32, #tpu.memory_space<vmem>>, vector<32x2xf32>
    %2 = vector.extract_strided_slice %1 {offsets = [0, 0], sizes = [32, 1], strides = [1, 1]} : vector<32x2xf32> to vector<32x1xf32>
    %3 = vector.extract_strided_slice %0 {offsets = [0, 0], sizes = [1, 1024], strides = [1, 1]} : vector<2x1024xf32> to vector<1x1024xf32>
    %4 = vector.broadcast %2 : vector<32x1xf32> to vector<32x1024xf32>
    %5 = vector.broadcast %3 : vector<1x1024xf32> to vector<32x1024xf32>
    %6 = arith.mulf %4, %5 : vector<32x1024xf32>
    %7 = vector.extract_strided_slice %1 {offsets = [0, 1], sizes = [32, 1], strides = [1, 1]} : vector<32x2xf32> to vector<32x1xf32>
    %8 = vector.extract_strided_slice %0 {offsets = [1, 0], sizes = [1, 1024], strides = [1, 1]} : vector<2x1024xf32> to vector<1x1024xf32>
    %9 = vector.broadcast %7 : vector<32x1xf32> to vector<32x1024xf32>
    %10 = vector.broadcast %8 : vector<1x1024xf32> to vector<32x1024xf32>
    %11 = arith.mulf %9, %10 : vector<32x1024xf32>
    %12 = arith.addf %6, %11 : vector<32x1024xf32>
    %c0_3 = arith.constant 0 : index
    %c0_4 = arith.constant 0 : index
    %13 = vector.load %arg3[%c0_3, %c0_4] : memref<32x1xf32, #tpu.memory_space<vmem>>, vector<32x1xf32>
    %14 = vector.broadcast %13 : vector<32x1xf32> to vector<32x1024xf32>
    %15 = arith.addf %12, %14 : vector<32x1024xf32>
    %c0_5 = arith.constant 0 : index
    %c0_6 = arith.constant 0 : index
    %16 = vector.load %arg4[%c0_5, %c0_6] : memref<32x1xf32, #tpu.memory_space<vmem>>, vector<32x1xf32>
    %17 = vector.broadcast %16 : vector<32x1xf32> to vector<32x1024xf32>
    %18 = arith.subf %15, %17 : vector<32x1024xf32>
    %19 = arith.mulf %18, %18 : vector<32x1024xf32>
    %c0_7 = arith.constant 0 : index
    %c0_8 = arith.constant 0 : index
    %20 = vector.load %arg5[%c0_7, %c0_8] : memref<32x1xf32, #tpu.memory_space<vmem>>, vector<32x1xf32>
    %21 = vector.broadcast %20 : vector<32x1xf32> to vector<32x1024xf32>
    %22 = arith.mulf %19, %21 : vector<32x1024xf32>
    %23 = math.exp %22 : vector<32x1024xf32>
    %24 = arith.mulf %15, %23 : vector<32x1024xf32>
    %25 = math.tanh %24 : vector<32x1024xf32>
    %c0_9 = arith.constant 0 : index
    %c0_10 = arith.constant 0 : index
    %26 = vector.load %arg6[%c0_9, %c0_10] : memref<32x32xf32, #tpu.memory_space<vmem>>, vector<32x32xf32>
    %cst = arith.constant dense<0.000000e+00> : vector<32x1024xf32>
    %27 = tpu.matmul %26, %25, %cst {dimension_numbers = #tpu.dot_dimension_numbers<[1], [0], [0], [1], [0, 0, 1, 1], [], []>} : vector<32x32xf32>, vector<32x1024xf32>, vector<32x1024xf32> -> vector<32x1024xf32>
    %c0_11 = arith.constant 0 : index
    %c0_12 = arith.constant 0 : index
    %28 = vector.load %arg7[%c0_11, %c0_12] : memref<32x1xf32, #tpu.memory_space<vmem>>, vector<32x1xf32>
    %29 = vector.broadcast %28 : vector<32x1xf32> to vector<32x1024xf32>
    %30 = arith.addf %27, %29 : vector<32x1024xf32>
    %31 = math.tanh %30 : vector<32x1024xf32>
    %c0_13 = arith.constant 0 : index
    %c0_14 = arith.constant 0 : index
    %32 = vector.load %arg8[%c0_13, %c0_14] : memref<32x32xf32, #tpu.memory_space<vmem>>, vector<32x32xf32>
    %cst_15 = arith.constant dense<0.000000e+00> : vector<32x1024xf32>
    %33 = tpu.matmul %32, %31, %cst_15 {dimension_numbers = #tpu.dot_dimension_numbers<[1], [0], [0], [1], [0, 0, 1, 1], [], []>} : vector<32x32xf32>, vector<32x1024xf32>, vector<32x1024xf32> -> vector<32x1024xf32>
    %c0_16 = arith.constant 0 : index
    %c0_17 = arith.constant 0 : index
    %34 = vector.load %arg9[%c0_16, %c0_17] : memref<32x1xf32, #tpu.memory_space<vmem>>, vector<32x1xf32>
    %35 = vector.broadcast %34 : vector<32x1xf32> to vector<32x1024xf32>
    %36 = arith.addf %33, %35 : vector<32x1024xf32>
    %37 = math.tanh %36 : vector<32x1024xf32>
    %c0_18 = arith.constant 0 : index
    %c0_19 = arith.constant 0 : index
    %38 = vector.load %arg10[%c0_18, %c0_19] : memref<4x32xf32, #tpu.memory_space<vmem>>, vector<4x32xf32>
    %cst_20 = arith.constant dense<0.000000e+00> : vector<4x1024xf32>
    %39 = tpu.matmul %38, %37, %cst_20 {dimension_numbers = #tpu.dot_dimension_numbers<[1], [0], [0], [1], [0, 0, 1, 1], [], []>} : vector<4x32xf32>, vector<32x1024xf32>, vector<4x1024xf32> -> vector<4x1024xf32>
    %c0_21 = arith.constant 0 : index
    %c0_22 = arith.constant 0 : index
    %40 = vector.load %arg11[%c0_21, %c0_22] : memref<4x1xf32, #tpu.memory_space<vmem>>, vector<4x1xf32>
    %41 = vector.broadcast %40 : vector<4x1xf32> to vector<4x1024xf32>
    %42 = arith.addf %39, %41 : vector<4x1024xf32>
    %c0_23 = arith.constant 0 : index
    %c0_24 = arith.constant 0 : index
    %43 = vector.load %arg12[%c0_23, %c0_24] : memref<4x1024xf32, #tpu.memory_space<vmem>>, vector<4x1024xf32>
    tpu.vector_store %arg12[%c0_23, %c0_24], %42 {strides = array<i32>} : memref<4x1024xf32, #tpu.memory_space<vmem>>, vector<4x1024xf32>,
    return
  }
  func.func @transform_0(%arg0: i32) -> (i32, i32) {
    %c0_i32 = arith.constant 0 : i32
    %c0_i32_0 = arith.constant 0 : i32
    return %c0_i32, %arg0 : i32, i32
  }
  func.func @transform_1(%arg0: i32) -> (i32, i32) {
    %c0_i32 = arith.constant 0 : i32
    %c0_i32_0 = arith.constant 0 : i32
    %c0_i32_1 = arith.constant 0 : i32
    return %c0_i32, %c0_i32_0 : i32, i32
  }
  func.func @transform_2(%arg0: i32) -> (i32, i32) {
    %c0_i32 = arith.constant 0 : i32
    %c0_i32_0 = arith.constant 0 : i32
    %c0_i32_1 = arith.constant 0 : i32
    return %c0_i32, %c0_i32_0 : i32, i32
  }
  func.func @transform_3(%arg0: i32) -> (i32, i32) {
    %c0_i32 = arith.constant 0 : i32
    %c0_i32_0 = arith.constant 0 : i32
    %c0_i32_1 = arith.constant 0 : i32
    return %c0_i32, %c0_i32_0 : i32, i32
  }
  func.func @transform_4(%arg0: i32) -> (i32, i32) {
    %c0_i32 = arith.constant 0 : i32
    %c0_i32_0 = arith.constant 0 : i32
    %c0_i32_1 = arith.constant 0 : i32
    return %c0_i32, %c0_i32_0 : i32, i32
  }
  func.func @transform_5(%arg0: i32) -> (i32, i32) {
    %c0_i32 = arith.constant 0 : i32
    %c0_i32_0 = arith.constant 0 : i32
    %c0_i32_1 = arith.constant 0 : i32
    return %c0_i32, %c0_i32_0 : i32, i32
  }
  func.func @transform_6(%arg0: i32) -> (i32, i32) {
    %c0_i32 = arith.constant 0 : i32
    %c0_i32_0 = arith.constant 0 : i32
    %c0_i32_1 = arith.constant 0 : i32
    return %c0_i32, %c0_i32_0 : i32, i32
  }
  func.func @transform_7(%arg0: i32) -> (i32, i32) {
    %c0_i32 = arith.constant 0 : i32
    %c0_i32_0 = arith.constant 0 : i32
    %c0_i32_1 = arith.constant 0 : i32
    return %c0_i32, %c0_i32_0 : i32, i32
  }
  func.func @transform_8(%arg0: i32) -> (i32, i32) {
    %c0_i32 = arith.constant 0 : i32
    %c0_i32_0 = arith.constant 0 : i32
    %c0_i32_1 = arith.constant 0 : i32
    return %c0_i32, %c0_i32_0 : i32, i32
  }
  func.func @transform_9(%arg0: i32) -> (i32, i32) {
    %c0_i32 = arith.constant 0 : i32
    %c0_i32_0 = arith.constant 0 : i32
    %c0_i32_1 = arith.constant 0 : i32
    return %c0_i32, %c0_i32_0 : i32, i32
  }
  func.func @transform_10(%arg0: i32) -> (i32, i32) {
    %c0_i32 = arith.constant 0 : i32
    %c0_i32_0 = arith.constant 0 : i32
    %c0_i32_1 = arith.constant 0 : i32
    return %c0_i32, %c0_i32_0 : i32, i32
  }
  func.func @transform_11(%arg0: i32) -> (i32, i32) {
    %c0_i32 = arith.constant 0 : i32
    %c0_i32_0 = arith.constant 0 : i32
    return %c0_i32, %arg0 : i32, i32
  }
}

</mosaic_0001>

<llo_original>
// kernel: tpu_custom_call.1
$region0: #{tpu_custom_call.1}
  #allocation0 [shape = 'u32[]', space=smem, size = 0x4, offset = 0x4, fixed_abs, tag = 'smem constant byte address 0x4 - core index']
  #allocation1 [shape = 'u32[144,128]{1,0:T(1,128)}', space=vmem, size = 0x12000, scoped, tag = 'internal scratch']
  %s0 = inlined_call_operand.vmem [shape: f32[2,1024], index: 0, kind: input, shape index: {}]
  %s1 = inlined_call_operand.vmem [shape: f32[32,2], index: 1, kind: input, shape index: {}]
  %s2 = inlined_call_operand.vmem [shape: f32[32,1], index: 2, kind: input, shape index: {}]
  %s3 = inlined_call_operand.vmem [shape: f32[32,1], index: 3, kind: input, shape index: {}]
  %s4 = inlined_call_operand.vmem [shape: f32[32,1], index: 4, kind: input, shape index: {}]
  %s5 = inlined_call_operand.vmem [shape: f32[32,32], index: 5, kind: input, shape index: {}]
  %s6 = inlined_call_operand.vmem [shape: f32[32,1], index: 6, kind: input, shape index: {}]
  %s7 = inlined_call_operand.vmem [shape: f32[32,32], index: 7, kind: input, shape index: {}]
  %s8 = inlined_call_operand.vmem [shape: f32[32,1], index: 8, kind: input, shape index: {}]
  %s9 = inlined_call_operand.vmem [shape: f32[4,32], index: 9, kind: input, shape index: {}]
  %s10 = inlined_call_operand.vmem [shape: f32[4,1], index: 10, kind: input, shape index: {}]
  %s11 = inlined_call_operand.hbm [shape: f32[4,1024], index: 11, kind: output, shape index: {}]
  %s12 = sld [smem:[#allocation0]]
  $region54: #{tpu_custom_call.1} parent=0
    _
  %s14 = ssub.s32 1, %s12
  %s15 = scalar_select 0, %s14, %s12
  $region1: #{tpu_custom_call.1} parent=0
    #allocation2 [shape = 'u8[16384]{0}', space=vmem, size = 0x4000, scoped, tag = 'output window, operand 0, single buffered']
    #allocation3 [shape = 's32[1]{0}', space=sflag, size = 0x4, scoped, tag = 'scoped memory for tpu_custom_call.1']
    %16 = vsyncpa [#allocation3], 0
    // Predicated region
    $region2: #{tpu_custom_call.1} parent=1 // pred_check
      _
    $region3: #{tpu_custom_call.1} parent=1 // pred_check_branch
      %18 = sbr.rel (0) target = $region5
    $region4: #{tpu_custom_call.1} parent=1 // pred_region
      _
    $region5: #{tpu_custom_call.1} parent=1 // pred_fallthru
      _
    // Predicated region
    $region6: #{tpu_custom_call.1} parent=1 // pred_check
      _
    $region7: #{tpu_custom_call.1} parent=1 // pred_check_branch
      %20 = sbr.rel (0) target = $region9
    $region8: #{tpu_custom_call.1} parent=1 // pred_region
      _
    $region9: #{tpu_custom_call.1} parent=1 // pred_fallthru
      _
    // Predicated region
    $region10: #{tpu_custom_call.1} parent=1 // pred_check
      _
    $region11: #{tpu_custom_call.1} parent=1 // pred_check_branch
      %22 = sbr.rel (0) target = $region13
    $region12: #{tpu_custom_call.1} parent=1 // pred_region
      _
    $region13: #{tpu_custom_call.1} parent=1 // pred_fallthru
      _
    // Predicated region
    $region14: #{tpu_custom_call.1} parent=1 // pred_check
      _
    $region15: #{tpu_custom_call.1} parent=1 // pred_check_branch
      %24 = sbr.rel (0) target = $region17
    $region16: #{tpu_custom_call.1} parent=1 // pred_region
      _
    $region17: #{tpu_custom_call.1} parent=1 // pred_fallthru
      _
    // Predicated region
    $region18: #{tpu_custom_call.1} parent=1 // pred_check
      _
    $region19: #{tpu_custom_call.1} parent=1 // pred_check_branch
      %26 = sbr.rel (0) target = $region21
    $region20: #{tpu_custom_call.1} parent=1 // pred_region
      _
    $region21: #{tpu_custom_call.1} parent=1 // pred_fallthru
      _
    // Predicated region
    $region22: #{tpu_custom_call.1} parent=1 // pred_check
      _
    $region23: #{tpu_custom_call.1} parent=1 // pred_check_branch
      %28 = sbr.rel (0) target = $region25
    $region24: #{tpu_custom_call.1} parent=1 // pred_region
      _
    $region25: #{tpu_custom_call.1} parent=1 // pred_fallthru
      _
    // Predicated region
    $region26: #{tpu_custom_call.1} parent=1 // pred_check
      _
    $region27: #{tpu_custom_call.1} parent=1 // pred_check_branch
      %30 = sbr.rel (0) target = $region29
    $region28: #{tpu_custom_call.1} parent=1 // pred_region
      _
    $region29: #{tpu_custom_call.1} parent=1 // pred_fallthru
      _
    // Predicated region
    $region30: #{tpu_custom_call.1} parent=1 // pred_check
      _
    $region31: #{tpu_custom_call.1} parent=1 // pred_check_branch
      %32 = sbr.rel (0) target = $region33
    $region32: #{tpu_custom_call.1} parent=1 // pred_region
      _
    $region33: #{tpu_custom_call.1} parent=1 // pred_fallthru
      _
    // Predicated region
    $region34: #{tpu_custom_call.1} parent=1 // pred_check
      _
    $region35: #{tpu_custom_call.1} parent=1 // pred_check_branch
      %34 = sbr.rel (0) target = $region37
    $region36: #{tpu_custom_call.1} parent=1 // pred_region
      _
    $region37: #{tpu_custom_call.1} parent=1 // pred_fallthru
      _
    // Predicated region
    $region38: #{tpu_custom_call.1} parent=1 // pred_check
      _
    $region39: #{tpu_custom_call.1} parent=1 // pred_check_branch
      %36 = sbr.rel (0) target = $region41
    $region40: #{tpu_custom_call.1} parent=1 // pred_region
      _
    $region41: #{tpu_custom_call.1} parent=1 // pred_fallthru
      _
    // Predicated region
    $region42: #{tpu_custom_call.1} parent=1 // pred_check
      _
    $region43: #{tpu_custom_call.1} parent=1 // pred_check_branch
      %38 = sbr.rel (0) target = $region45
    $region44: #{tpu_custom_call.1} parent=1 // pred_region
      _
    $region45: #{tpu_custom_call.1} parent=1 // pred_fallthru
      _
    %v39 = vld [vmem:[%s0] sm:$0xff]
    %v40 = vld [vmem:[%s0 + $0x8] sm:$0xff]
    %v41 = vld [vmem:[%s1] sm:$0xff]
    %v42 = vld [vmem:[%s1 + $0x8] sm:$0xff]
    %v43 = vld [vmem:[%s1 + $0x10] sm:$0xff]
    %v44 = vld [vmem:[%s1 + $0x18] sm:$0xff]
    %46 = vset.pattern.permute.xlu0 0
    %47 = vperm.xlu0 %46, %v41
    %v48 = vpop.permute.xlu0 %47
    %51 = vset.pattern.permute.xlu0 0
    %52 = vperm.xlu0 %51, %v42
    %v53 = vpop.permute.xlu0 %52
    %56 = vset.pattern.permute.xlu0 0
    %57 = vperm.xlu0 %56, %v43
    %v58 = vpop.permute.xlu0 %57
    %61 = vset.pattern.permute.xlu0 0
    %62 = vperm.xlu0 %61, %v44
    %v63 = vpop.permute.xlu0 %62
    %v67 = vlaneseq
    %v68 = vshrl.u32 %v67, 7
    %v69 = vsub.s32 0, %v68
    %v70 = vrot.slane %v39, %v69
    %v71 = vlaneseq
    %v72 = vshrl.u32 %v71, 7
    %v73 = vsub.s32 2, %v72
    %v74 = vrot.slane %v39, %v73
    %v75 = vlaneseq
    %v76 = vshrl.u32 %v75, 7
    %v77 = vsub.s32 4, %v76
    %v78 = vrot.slane %v39, %v77
    %v79 = vlaneseq
    %v80 = vshrl.u32 %v79, 7
    %v81 = vsub.s32 6, %v80
    %v82 = vrot.slane %v39, %v81
    %v83 = vlaneseq
    %v84 = vshrl.u32 %v83, 7
    %v85 = vsub.s32 0, %v84
    %v86 = vrot.slane %v40, %v85
    %v87 = vlaneseq
    %v88 = vshrl.u32 %v87, 7
    %v89 = vsub.s32 2, %v88
    %v90 = vrot.slane %v40, %v89
    %v91 = vlaneseq
    %v92 = vshrl.u32 %v91, 7
    %v93 = vsub.s32 4, %v92
    %v94 = vrot.slane %v40, %v93
    %v95 = vlaneseq
    %v96 = vshrl.u32 %v95, 7
    %v97 = vsub.s32 6, %v96
    %v98 = vrot.slane %v40, %v97
    %v107 = vlaneseq
    %v108 = vshrl.u32 %v107, 7
    %v109 = vsub.s32 0, %v108
    %v110 = vrot.slane %v70, %v109
    %v111 = vlaneseq
    %v112 = vshrl.u32 %v111, 7
    %v113 = vsub.s32 0, %v112
    %v114 = vrot.slane %v74, %v113
    %v115 = vlaneseq
    %v116 = vshrl.u32 %v115, 7
    %v117 = vsub.s32 0, %v116
    %v118 = vrot.slane %v78, %v117
    %v119 = vlaneseq
    %v120 = vshrl.u32 %v119, 7
    %v121 = vsub.s32 0, %v120
    %v122 = vrot.slane %v82, %v121
    %v123 = vlaneseq
    %v124 = vshrl.u32 %v123, 7
    %v125 = vsub.s32 0, %v124
    %v126 = vrot.slane %v86, %v125
    %v127 = vlaneseq
    %v128 = vshrl.u32 %v127, 7
    %v129 = vsub.s32 0, %v128
    %v130 = vrot.slane %v90, %v129
    %v131 = vlaneseq
    %v132 = vshrl.u32 %v131, 7
    %v133 = vsub.s32 0, %v132
    %v134 = vrot.slane %v94, %v133
    %v135 = vlaneseq
    %v136 = vshrl.u32 %v135, 7
    %v137 = vsub.s32 0, %v136
    %v138 = vrot.slane %v98, %v137
    %v139 = vmul.f32 %v48, %v110
    %v140 = vmul.f32 %v48, %v114
    %v141 = vmul.f32 %v48, %v118
    %v142 = vmul.f32 %v48, %v122
    %v143 = vmul.f32 %v48, %v126
    %v144 = vmul.f32 %v48, %v130
    %v145 = vmul.f32 %v48, %v134
    %v146 = vmul.f32 %v48, %v138
    %v147 = vmul.f32 %v53, %v110
    %v148 = vmul.f32 %v53, %v114
    %v149 = vmul.f32 %v53, %v118
    %v150 = vmul.f32 %v53, %v122
    %v151 = vmul.f32 %v53, %v126
    %v152 = vmul.f32 %v53, %v130
    %v153 = vmul.f32 %v53, %v134
    %v154 = vmul.f32 %v53, %v138
    %v155 = vmul.f32 %v58, %v110
    %v156 = vmul.f32 %v58, %v114
    %v157 = vmul.f32 %v58, %v118
    %v158 = vmul.f32 %v58, %v122
    %v159 = vmul.f32 %v58, %v126
    %v160 = vmul.f32 %v58, %v130
    %v161 = vmul.f32 %v58, %v134
    %v162 = vmul.f32 %v58, %v138
    %v163 = vmul.f32 %v63, %v110
    %v164 = vmul.f32 %v63, %v114
    %v165 = vmul.f32 %v63, %v118
    %v166 = vmul.f32 %v63, %v122
    %v167 = vmul.f32 %v63, %v126
    %v168 = vmul.f32 %v63, %v130
    %v169 = vmul.f32 %v63, %v134
    %v170 = vmul.f32 %v63, %v138
    %171 = vset.pattern.permute.xlu0 1
    %172 = vperm.xlu0 %171, %v41
    %v173 = vpop.permute.xlu0 %172
    %175 = vset.pattern.permute.xlu0 1
    %176 = vperm.xlu0 %175, %v42
    %v177 = vpop.permute.xlu0 %176
    %179 = vset.pattern.permute.xlu0 1
    %180 = vperm.xlu0 %179, %v43
    %v181 = vpop.permute.xlu0 %180
    %183 = vset.pattern.permute.xlu0 1
    %184 = vperm.xlu0 %183, %v44
    %v185 = vpop.permute.xlu0 %184
    %v187 = vlaneseq
    %v188 = vshrl.u32 %v187, 7
    %v189 = vsub.s32 1, %v188
    %v190 = vrot.slane %v39, %v189
    %v191 = vlaneseq
    %v192 = vshrl.u32 %v191, 7
    %v193 = vsub.s32 3, %v192
    %v194 = vrot.slane %v39, %v193
    %v195 = vlaneseq
    %v196 = vshrl.u32 %v195, 7
    %v197 = vsub.s32 5, %v196
    %v198 = vrot.slane %v39, %v197
    %v199 = vlaneseq
    %v200 = vshrl.u32 %v199, 7
    %v201 = vsub.s32 7, %v200
    %v202 = vrot.slane %v39, %v201
    %v203 = vlaneseq
    %v204 = vshrl.u32 %v203, 7
    %v205 = vsub.s32 1, %v204
    %v206 = vrot.slane %v40, %v205
    %v207 = vlaneseq
    %v208 = vshrl.u32 %v207, 7
    %v209 = vsub.s32 3, %v208
    %v210 = vrot.slane %v40, %v209
    %v211 = vlaneseq
    %v212 = vshrl.u32 %v211, 7
    %v213 = vsub.s32 5, %v212
    %v214 = vrot.slane %v40, %v213
    %v215 = vlaneseq
    %v216 = vshrl.u32 %v215, 7
    %v217 = vsub.s32 7, %v216
    %v218 = vrot.slane %v40, %v217
    %v227 = vlaneseq
    %v228 = vshrl.u32 %v227, 7
    %v229 = vsub.s32 1, %v228
    %v230 = vrot.slane %v190, %v229
    %v231 = vlaneseq
    %v232 = vshrl.u32 %v231, 7
    %v233 = vsub.s32 1, %v232
    %v234 = vrot.slane %v194, %v233
    %v235 = vlaneseq
    %v236 = vshrl.u32 %v235, 7
    %v237 = vsub.s32 1, %v236
    %v238 = vrot.slane %v198, %v237
    %v239 = vlaneseq
    %v240 = vshrl.u32 %v239, 7
    %v241 = vsub.s32 1, %v240
    %v242 = vrot.slane %v202, %v241
    %v243 = vlaneseq
    %v244 = vshrl.u32 %v243, 7
    %v245 = vsub.s32 1, %v244
    %v246 = vrot.slane %v206, %v245
    %v247 = vlaneseq
    %v248 = vshrl.u32 %v247, 7
    %v249 = vsub.s32 1, %v248
    %v250 = vrot.slane %v210, %v249
    %v251 = vlaneseq
    %v252 = vshrl.u32 %v251, 7
    %v253 = vsub.s32 1, %v252
    %v254 = vrot.slane %v214, %v253
    %v255 = vlaneseq
    %v256 = vshrl.u32 %v255, 7
    %v257 = vsub.s32 1, %v256
    %v258 = vrot.slane %v218, %v257
    %v259 = vmul.f32 %v173, %v230
    %v260 = vmul.f32 %v173, %v234
    %v261 = vmul.f32 %v173, %v238
    %v262 = vmul.f32 %v173, %v242
    %v263 = vmul.f32 %v173, %v246
    %v264 = vmul.f32 %v173, %v250
    %v265 = vmul.f32 %v173, %v254
    %v266 = vmul.f32 %v173, %v258
    %v267 = vmul.f32 %v177, %v230
    %v268 = vmul.f32 %v177, %v234
    %v269 = vmul.f32 %v177, %v238
    %v270 = vmul.f32 %v177, %v242
    %v271 = vmul.f32 %v177, %v246
    %v272 = vmul.f32 %v177, %v250
    %v273 = vmul.f32 %v177, %v254
    %v274 = vmul.f32 %v177, %v258
    %v275 = vmul.f32 %v181, %v230
    %v276 = vmul.f32 %v181, %v234
    %v277 = vmul.f32 %v181, %v238
    %v278 = vmul.f32 %v181, %v242
    %v279 = vmul.f32 %v181, %v246
    %v280 = vmul.f32 %v181, %v250
    %v281 = vmul.f32 %v181, %v254
    %v282 = vmul.f32 %v181, %v258
    %v283 = vmul.f32 %v185, %v230
    %v284 = vmul.f32 %v185, %v234
    %v285 = vmul.f32 %v185, %v238
    %v286 = vmul.f32 %v185, %v242
    %v287 = vmul.f32 %v185, %v246
    %v288 = vmul.f32 %v185, %v250
    %v289 = vmul.f32 %v185, %v254
    %v290 = vmul.f32 %v185, %v258
    %v291 = vadd.f32 %v139, %v259
    %v292 = vadd.f32 %v140, %v260
    %v293 = vadd.f32 %v141, %v261
    %v294 = vadd.f32 %v142, %v262
    %v295 = vadd.f32 %v143, %v263
    %v296 = vadd.f32 %v144, %v264
    %v297 = vadd.f32 %v145, %v265
    %v298 = vadd.f32 %v146, %v266
    %v299 = vadd.f32 %v147, %v267
    %v300 = vadd.f32 %v148, %v268
    %v301 = vadd.f32 %v149, %v269
    %v302 = vadd.f32 %v150, %v270
    %v303 = vadd.f32 %v151, %v271
    %v304 = vadd.f32 %v152, %v272
    %v305 = vadd.f32 %v153, %v273
    %v306 = vadd.f32 %v154, %v274
    %v307 = vadd.f32 %v155, %v275
    %v308 = vadd.f32 %v156, %v276
    %v309 = vadd.f32 %v157, %v277
    %v310 = vadd.f32 %v158, %v278
    %v311 = vadd.f32 %v159, %v279
    %v312 = vadd.f32 %v160, %v280
    %v313 = vadd.f32 %v161, %v281
    %v314 = vadd.f32 %v162, %v282
    %v315 = vadd.f32 %v163, %v283
    %v316 = vadd.f32 %v164, %v284
    %v317 = vadd.f32 %v165, %v285
    %v318 = vadd.f32 %v166, %v286
    %v319 = vadd.f32 %v167, %v287
    %v320 = vadd.f32 %v168, %v288
    %v321 = vadd.f32 %v169, %v289
    %v322 = vadd.f32 %v170, %v290
    %v323 = vld [vmem:[%s2] sm:$0xff]
    %v324 = vld [vmem:[%s2 + $0x8] sm:$0xff]
    %v325 = vld [vmem:[%s2 + $0x10] sm:$0xff]
    %v326 = vld [vmem:[%s2 + $0x18] sm:$0xff]
    %328 = vset.pattern.permute.xlu0 0
    %329 = vperm.xlu0 %328, %v323
    %v330 = vpop.permute.xlu0 %329
    %333 = vset.pattern.permute.xlu0 0
    %334 = vperm.xlu0 %333, %v324
    %v335 = vpop.permute.xlu0 %334
    %338 = vset.pattern.permute.xlu0 0
    %339 = vperm.xlu0 %338, %v325
    %v340 = vpop.permute.xlu0 %339
    %343 = vset.pattern.permute.xlu0 0
    %344 = vperm.xlu0 %343, %v326
    %v345 = vpop.permute.xlu0 %344
    %v347 = vadd.f32 %v291, %v330
    %v348 = vadd.f32 %v292, %v330
    %v349 = vadd.f32 %v293, %v330
    %v350 = vadd.f32 %v294, %v330
    %v351 = vadd.f32 %v295, %v330
    %v352 = vadd.f32 %v296, %v330
    %v353 = vadd.f32 %v297, %v330
    %v354 = vadd.f32 %v298, %v330
    %v355 = vadd.f32 %v299, %v335
    %v356 = vadd.f32 %v300, %v335
    %v357 = vadd.f32 %v301, %v335
    %v358 = vadd.f32 %v302, %v335
    %v359 = vadd.f32 %v303, %v335
    %v360 = vadd.f32 %v304, %v335
    %v361 = vadd.f32 %v305, %v335
    %v362 = vadd.f32 %v306, %v335
    %v363 = vadd.f32 %v307, %v340
    %v364 = vadd.f32 %v308, %v340
    %v365 = vadd.f32 %v309, %v340
    %v366 = vadd.f32 %v310, %v340
    %v367 = vadd.f32 %v311, %v340
    %v368 = vadd.f32 %v312, %v340
    %v369 = vadd.f32 %v313, %v340
    %v370 = vadd.f32 %v314, %v340
    %v371 = vadd.f32 %v315, %v345
    %v372 = vadd.f32 %v316, %v345
    %v373 = vadd.f32 %v317, %v345
    %v374 = vadd.f32 %v318, %v345
    %v375 = vadd.f32 %v319, %v345
    %v376 = vadd.f32 %v320, %v345
    %v377 = vadd.f32 %v321, %v345
    %v378 = vadd.f32 %v322, %v345
    %v379 = vld [vmem:[%s3] sm:$0xff]
    %v380 = vld [vmem:[%s3 + $0x8] sm:$0xff]
    %v381 = vld [vmem:[%s3 + $0x10] sm:$0xff]
    %v382 = vld [vmem:[%s3 + $0x18] sm:$0xff]
    %384 = vset.pattern.permute.xlu0 0
    %385 = vperm.xlu0 %384, %v379
    %v386 = vpop.permute.xlu0 %385
    %389 = vset.pattern.permute.xlu0 0
    %390 = vperm.xlu0 %389, %v380
    %v391 = vpop.permute.xlu0 %390
    %394 = vset.pattern.permute.xlu0 0
    %395 = vperm.xlu0 %394, %v381
    %v396 = vpop.permute.xlu0 %395
    %399 = vset.pattern.permute.xlu0 0
    %400 = vperm.xlu0 %399, %v382
    %v401 = vpop.permute.xlu0 %400
    %v403 = vsub.f32 %v347, %v386
    %v404 = vsub.f32 %v348, %v386
    %v405 = vsub.f32 %v349, %v386
    %v406 = vsub.f32 %v350, %v386
    %v407 = vsub.f32 %v351, %v386
    %v408 = vsub.f32 %v352, %v386
    %v409 = vsub.f32 %v353, %v386
    %v410 = vsub.f32 %v354, %v386
    %v411 = vsub.f32 %v355, %v391
    %v412 = vsub.f32 %v356, %v391
    %v413 = vsub.f32 %v357, %v391
    %v414 = vsub.f32 %v358, %v391
    %v415 = vsub.f32 %v359, %v391
    %v416 = vsub.f32 %v360, %v391
    %v417 = vsub.f32 %v361, %v391
    %v418 = vsub.f32 %v362, %v391
    %v419 = vsub.f32 %v363, %v396
    %v420 = vsub.f32 %v364, %v396
    %v421 = vsub.f32 %v365, %v396
    %v422 = vsub.f32 %v366, %v396
    %v423 = vsub.f32 %v367, %v396
    %v424 = vsub.f32 %v368, %v396
    %v425 = vsub.f32 %v369, %v396
    %v426 = vsub.f32 %v370, %v396
    %v427 = vsub.f32 %v371, %v401
    %v428 = vsub.f32 %v372, %v401
    %v429 = vsub.f32 %v373, %v401
    %v430 = vsub.f32 %v374, %v401
    %v431 = vsub.f32 %v375, %v401
    %v432 = vsub.f32 %v376, %v401
    %v433 = vsub.f32 %v377, %v401
    %v434 = vsub.f32 %v378, %v401
    %v435 = vmul.f32 %v403, %v403
    %v436 = vmul.f32 %v404, %v404
    %v437 = vmul.f32 %v405, %v405
    %v438 = vmul.f32 %v406, %v406
    %v439 = vmul.f32 %v407, %v407
    %v440 = vmul.f32 %v408, %v408
    %v441 = vmul.f32 %v409, %v409
    %v442 = vmul.f32 %v410, %v410
    %v443 = vmul.f32 %v411, %v411
    %v444 = vmul.f32 %v412, %v412
    %v445 = vmul.f32 %v413, %v413
    %v446 = vmul.f32 %v414, %v414
    %v447 = vmul.f32 %v415, %v415
    %v448 = vmul.f32 %v416, %v416
    %v449 = vmul.f32 %v417, %v417
    %v450 = vmul.f32 %v418, %v418
    %v451 = vmul.f32 %v419, %v419
    %v452 = vmul.f32 %v420, %v420
    %v453 = vmul.f32 %v421, %v421
    %v454 = vmul.f32 %v422, %v422
    %v455 = vmul.f32 %v423, %v423
    %v456 = vmul.f32 %v424, %v424
    %v457 = vmul.f32 %v425, %v425
    %v458 = vmul.f32 %v426, %v426
    %v459 = vmul.f32 %v427, %v427
    %v460 = vmul.f32 %v428, %v428
    %v461 = vmul.f32 %v429, %v429
    %v462 = vmul.f32 %v430, %v430
    %v463 = vmul.f32 %v431, %v431
    %v464 = vmul.f32 %v432, %v432
    %v465 = vmul.f32 %v433, %v433
    %v466 = vmul.f32 %v434, %v434
    %v467 = vld [vmem:[%s4] sm:$0xff]
    %v468 = vld [vmem:[%s4 + $0x8] sm:$0xff]
    %v469 = vld [vmem:[%s4 + $0x10] sm:$0xff]
    %v470 = vld [vmem:[%s4 + $0x18] sm:$0xff]
    %472 = vset.pattern.permute.xlu0 0
    %473 = vperm.xlu0 %472, %v467
    %v474 = vpop.permute.xlu0 %473
    %477 = vset.pattern.permute.xlu0 0
    %478 = vperm.xlu0 %477, %v468
    %v479 = vpop.permute.xlu0 %478
    %482 = vset.pattern.permute.xlu0 0
    %483 = vperm.xlu0 %482, %v469
    %v484 = vpop.permute.xlu0 %483
    %487 = vset.pattern.permute.xlu0 0
    %488 = vperm.xlu0 %487, %v470
    %v489 = vpop.permute.xlu0 %488
    %v491 = vmul.f32 %v435, %v474
    %v492 = vmul.f32 %v436, %v474
    %v493 = vmul.f32 %v437, %v474
    %v494 = vmul.f32 %v438, %v474
    %v495 = vmul.f32 %v439, %v474
    %v496 = vmul.f32 %v440, %v474
    %v497 = vmul.f32 %v441, %v474
    %v498 = vmul.f32 %v442, %v474
    %v499 = vmul.f32 %v443, %v479
    %v500 = vmul.f32 %v444, %v479
    %v501 = vmul.f32 %v445, %v479
    %v502 = vmul.f32 %v446, %v479
    %v503 = vmul.f32 %v447, %v479
    %v504 = vmul.f32 %v448, %v479
    %v505 = vmul.f32 %v449, %v479
    %v506 = vmul.f32 %v450, %v479
    %v507 = vmul.f32 %v451, %v484
    %v508 = vmul.f32 %v452, %v484
    %v509 = vmul.f32 %v453, %v484
    %v510 = vmul.f32 %v454, %v484
    %v511 = vmul.f32 %v455, %v484
    %v512 = vmul.f32 %v456, %v484
    %v513 = vmul.f32 %v457, %v484
    %v514 = vmul.f32 %v458, %v484
    %v515 = vmul.f32 %v459, %v489
    %v516 = vmul.f32 %v460, %v489
    %v517 = vmul.f32 %v461, %v489
    %v518 = vmul.f32 %v462, %v489
    %v519 = vmul.f32 %v463, %v489
    %v520 = vmul.f32 %v464, %v489
    %v521 = vmul.f32 %v465, %v489
    %v522 = vmul.f32 %v466, %v489
    %v523 = vmul.f32 %v491, 1.442695
    %v524 = vpow.pop %v523
    %v525 = vmul.f32 %v492, 1.442695
    %v526 = vpow.pop %v525
    %v527 = vmul.f32 %v493, 1.442695
    %v528 = vpow.pop %v527
    %v529 = vmul.f32 %v494, 1.442695
    %v530 = vpow.pop %v529
    %v531 = vmul.f32 %v495, 1.442695
    %v532 = vpow.pop %v531
    %v533 = vmul.f32 %v496, 1.442695
    %v534 = vpow.pop %v533
    %v535 = vmul.f32 %v497, 1.442695
    %v536 = vpow.pop %v535
    %v537 = vmul.f32 %v498, 1.442695
    %v538 = vpow.pop %v537
    %v539 = vmul.f32 %v499, 1.442695
    %v540 = vpow.pop %v539
    %v541 = vmul.f32 %v500, 1.442695
    %v542 = vpow.pop %v541
    %v543 = vmul.f32 %v501, 1.442695
    %v544 = vpow.pop %v543
    %v545 = vmul.f32 %v502, 1.442695
    %v546 = vpow.pop %v545
    %v547 = vmul.f32 %v503, 1.442695
    %v548 = vpow.pop %v547
    %v549 = vmul.f32 %v504, 1.442695
    %v550 = vpow.pop %v549
    %v551 = vmul.f32 %v505, 1.442695
    %v552 = vpow.pop %v551
    %v553 = vmul.f32 %v506, 1.442695
    %v554 = vpow.pop %v553
    %v555 = vmul.f32 %v507, 1.442695
    %v556 = vpow.pop %v555
    %v557 = vmul.f32 %v508, 1.442695
    %v558 = vpow.pop %v557
    %v559 = vmul.f32 %v509, 1.442695
    %v560 = vpow.pop %v559
    %v561 = vmul.f32 %v510, 1.442695
    %v562 = vpow.pop %v561
    %v563 = vmul.f32 %v511, 1.442695
    %v564 = vpow.pop %v563
    %v565 = vmul.f32 %v512, 1.442695
    %v566 = vpow.pop %v565
    %v567 = vmul.f32 %v513, 1.442695
    %v568 = vpow.pop %v567
    %v569 = vmul.f32 %v514, 1.442695
    %v570 = vpow.pop %v569
    %v571 = vmul.f32 %v515, 1.442695
    %v572 = vpow.pop %v571
    %v573 = vmul.f32 %v516, 1.442695
    %v574 = vpow.pop %v573
    %v575 = vmul.f32 %v517, 1.442695
    %v576 = vpow.pop %v575
    %v577 = vmul.f32 %v518, 1.442695
    %v578 = vpow.pop %v577
    %v579 = vmul.f32 %v519, 1.442695
    %v580 = vpow.pop %v579
    %v581 = vmul.f32 %v520, 1.442695
    %v582 = vpow.pop %v581
    %v583 = vmul.f32 %v521, 1.442695
    %v584 = vpow.pop %v583
    %v585 = vmul.f32 %v522, 1.442695
    %v586 = vpow.pop %v585
    %v587 = vmul.f32 %v347, %v524
    %v588 = vmul.f32 %v348, %v526
    %v589 = vmul.f32 %v349, %v528
    %v590 = vmul.f32 %v350, %v530
    %v591 = vmul.f32 %v351, %v532
    %v592 = vmul.f32 %v352, %v534
    %v593 = vmul.f32 %v353, %v536
    %v594 = vmul.f32 %v354, %v538
    %v595 = vmul.f32 %v355, %v540
    %v596 = vmul.f32 %v356, %v542
    %v597 = vmul.f32 %v357, %v544
    %v598 = vmul.f32 %v358, %v546
    %v599 = vmul.f32 %v359, %v548
    %v600 = vmul.f32 %v360, %v550
    %v601 = vmul.f32 %v361, %v552
    %v602 = vmul.f32 %v362, %v554
    %v603 = vmul.f32 %v363, %v556
    %v604 = vmul.f32 %v364, %v558
    %v605 = vmul.f32 %v365, %v560
    %v606 = vmul.f32 %v366, %v562
    %v607 = vmul.f32 %v367, %v564
    %v608 = vmul.f32 %v368, %v566
    %v609 = vmul.f32 %v369, %v568
    %v610 = vmul.f32 %v370, %v570
    %v611 = vmul.f32 %v371, %v572
    %v612 = vmul.f32 %v372, %v574
    %v613 = vmul.f32 %v373, %v576
    %v614 = vmul.f32 %v374, %v578
    %v615 = vmul.f32 %v375, %v580
    %v616 = vmul.f32 %v376, %v582
    %v617 = vmul.f32 %v377, %v584
    %v618 = vmul.f32 %v378, %v586
    %v619 = vtanh.pop %v587
    %v620 = vtanh.pop %v588
    %v621 = vtanh.pop %v589
    %v622 = vtanh.pop %v590
    %v623 = vtanh.pop %v591
    %v624 = vtanh.pop %v592
    %v625 = vtanh.pop %v593
    %v626 = vtanh.pop %v594
    %v627 = vtanh.pop %v595
    %v628 = vtanh.pop %v596
    %v629 = vtanh.pop %v597
    %v630 = vtanh.pop %v598
    %v631 = vtanh.pop %v599
    %v632 = vtanh.pop %v600
    %v633 = vtanh.pop %v601
    %v634 = vtanh.pop %v602
    %v635 = vtanh.pop %v603
    %v636 = vtanh.pop %v604
    %v637 = vtanh.pop %v605
    %v638 = vtanh.pop %v606
    %v639 = vtanh.pop %v607
    %v640 = vtanh.pop %v608
    %v641 = vtanh.pop %v609
    %v642 = vtanh.pop %v610
    %v643 = vtanh.pop %v611
    %v644 = vtanh.pop %v612
    %v645 = vtanh.pop %v613
    %v646 = vtanh.pop %v614
    %v647 = vtanh.pop %v615
    %v648 = vtanh.pop %v616
    %v649 = vtanh.pop %v617
    %v650 = vtanh.pop %v618
    %v651 = vld [vmem:[%s5] sm:$0xff]
    %v652 = vld [vmem:[%s5 + $0x8] sm:$0xff]
    %v653 = vld [vmem:[%s5 + $0x10] sm:$0xff]
    %v654 = vld [vmem:[%s5 + $0x18] sm:$0xff]
    %v655 = vld [vmem:[%s6] sm:$0xff]
    %v656 = vld [vmem:[%s6 + $0x8] sm:$0xff]
    %v657 = vld [vmem:[%s6 + $0x10] sm:$0xff]
    %v658 = vld [vmem:[%s6 + $0x18] sm:$0xff]
    %660 = vset.pattern.permute.xlu0 0
    %661 = vperm.xlu0 %660, %v655
    %v662 = vpop.permute.xlu0 %661
    %665 = vset.pattern.permute.xlu0 0
    %666 = vperm.xlu0 %665, %v656
    %v667 = vpop.permute.xlu0 %666
    %670 = vset.pattern.permute.xlu0 0
    %671 = vperm.xlu0 %670, %v657
    %v672 = vpop.permute.xlu0 %671
    %675 = vset.pattern.permute.xlu0 0
    %676 = vperm.xlu0 %675, %v658
    %v677 = vpop.permute.xlu0 %676
    %vm679 = vcmask 261120
    %v681 = vsel %vm679, %v651, 0
    %v684 = vsel %vm679, %v652, 0
    %v687 = vsel %vm679, %v653, 0
    %v690 = vsel %vm679, %v654, 0
    %692 = vmatprep.subr.mxu0 %v620
    %693 = vmatpush1.msra.mxu0 %v619
    %694 = vmatprep.subr.mxu0 %v628
    %695 = vmatpush1.msra.mxu0 %v627
    %696 = vmatprep.subr.mxu0 %v636
    %697 = vmatpush1.msra.mxu0 %v635
    %698 = vmatprep.subr.mxu0 %v644
    %699 = vmatpush1.msra.mxu0 %v643
    %700 = vmatprep.subr.mxu0 0.0
    %701 = vmatpush1.msra.mxu0 0.0
    %702 = vmatprep.subr.mxu0 0.0
    %703 = vmatpush1.msra.mxu0 0.0
    %704 = vmatprep.subr.mxu0 0.0
    %705 = vmatpush1.msra.mxu0 0.0
    %706 = vmatprep.subr.mxu0 0.0
    %707 = vmatpush1.msra.mxu0 0.0
    %708 = vmatprep.subr.mxu0 0.0
    %709 = vmatpush1.msra.mxu0 0.0
    %710 = vmatprep.subr.mxu0 0.0
    %711 = vmatpush1.msra.mxu0 0.0
    %712 = vmatprep.subr.mxu0 0.0
    %713 = vmatpush1.msra.mxu0 0.0
    %714 = vmatprep.subr.mxu0 0.0
    %715 = vmatpush1.msra.mxu0 0.0
    %716 = vmatprep.subr.mxu0 0.0
    %717 = vmatpush1.msra.mxu0 0.0
    %718 = vmatprep.subr.mxu0 0.0
    %719 = vmatpush1.msra.mxu0 0.0
    %720 = vmatprep.subr.mxu0 0.0
    %721 = vmatpush1.msra.mxu0 0.0
    %722 = vmatprep.subr.mxu0 0.0
    %723 = vmatpush1.msra.mxu0 0.0
    %724 = vmatprep.subr.mxu0 0.0
    %725 = vmatpush1.msra.mxu0 0.0
    %726 = vmatprep.subr.mxu0 0.0
    %727 = vmatpush1.msra.mxu0 0.0
    %728 = vmatprep.subr.mxu0 0.0
    %729 = vmatpush1.msra.mxu0 0.0
    %730 = vmatprep.subr.mxu0 0.0
    %731 = vmatpush1.msra.mxu0 0.0
    %732 = vmatprep.subr.mxu0 0.0
    %733 = vmatpush1.msra.mxu0 0.0
    %734 = vmatprep.subr.mxu0 0.0
    %735 = vmatpush1.msra.mxu0 0.0
    %736 = vmatprep.subr.mxu0 0.0
    %737 = vmatpush1.msra.mxu0 0.0
    %738 = vmatprep.subr.mxu0 0.0
    %739 = vmatpush1.msra.mxu0 0.0
    %740 = vmatprep.subr.mxu0 0.0
    %741 = vmatpush1.msra.mxu0 0.0
    %742 = vmatprep.subr.mxu0 0.0
    %743 = vmatpush1.msra.mxu0 0.0
    %744 = vmatprep.subr.mxu0 0.0
    %745 = vmatpush1.msra.mxu0 0.0
    %746 = vmatprep.subr.mxu0 0.0
    %747 = vmatpush1.msra.mxu0 0.0
    %748 = vmatprep.subr.mxu0 0.0
    %749 = vmatpush1.msra.mxu0 0.0
    %750 = vmatprep.subr.mxu0 0.0
    %751 = vmatpush1.msra.mxu0 0.0
    %752 = vmatprep.subr.mxu0 0.0
    %753 = vmatpush1.msra.mxu0 0.0
    %754 = vmatprep.subr.mxu0 0.0
    %755 = vmatpush1.msra.mxu0 0.0
    %756 = vmatprep.mubr.f32.mxu0 0.0
    %757 = vmatmul.mubr.f32.gmra.mrb[0].mxu0 %v681
    %v758 = vpop.f32.mrb[0].mxu0
    %v759 = vadd.f32 %v662, %v758
    %v760 = vpop.f32.mrb[0].mxu0
    %v761 = vadd.f32 %v662, %v760
    %762 = vmatprep.mubr.f32.mxu0 0.0
    %763 = vmatmul.mubr.f32.gmra.mrb[0].mxu0 %v684
    %v764 = vpop.f32.mrb[0].mxu0
    %v765 = vadd.f32 %v667, %v764
    %v766 = vpop.f32.mrb[0].mxu0
    %v767 = vadd.f32 %v667, %v766
    %768 = vmatprep.mubr.f32.mxu0 0.0
    %769 = vmatmul.mubr.f32.gmra.mrb[0].mxu0 %v687
    %v770 = vpop.f32.mrb[0].mxu0
    %v771 = vadd.f32 %v672, %v770
    %v772 = vpop.f32.mrb[0].mxu0
    %v773 = vadd.f32 %v672, %v772
    %774 = vmatprep.mubr.f32.mxu0 0.0
    %775 = vmatmul.mubr.f32.gmra.mrb[0].mxu0 %v690
    %v776 = vpop.f32.mrb[0].mxu0
    %v777 = vadd.f32 %v677, %v776
    %v778 = vpop.f32.mrb[0].mxu0
    %v779 = vadd.f32 %v677, %v778
    %780 = vdwg.mxu0
    %781 = vmatprep.subr.mxu0 %v622
    %782 = vmatpush1.msra.mxu0 %v621
    %783 = vmatprep.subr.mxu0 %v630
    %784 = vmatpush1.msra.mxu0 %v629
    %785 = vmatprep.subr.mxu0 %v638
    %786 = vmatpush1.msra.mxu0 %v637
    %787 = vmatprep.subr.mxu0 %v646
    %788 = vmatpush1.msra.mxu0 %v645
    %789 = vmatprep.subr.mxu0 0.0
    %790 = vmatpush1.msra.mxu0 0.0
    %791 = vmatprep.subr.mxu0 0.0
    %792 = vmatpush1.msra.mxu0 0.0
    %793 = vmatprep.subr.mxu0 0.0
    %794 = vmatpush1.msra.mxu0 0.0
    %795 = vmatprep.subr.mxu0 0.0
    %796 = vmatpush1.msra.mxu0 0.0
    %797 = vmatprep.subr.mxu0 0.0
    %798 = vmatpush1.msra.mxu0 0.0
    %799 = vmatprep.subr.mxu0 0.0
    %800 = vmatpush1.msra.mxu0 0.0
    %801 = vmatprep.subr.mxu0 0.0
    %802 = vmatpush1.msra.mxu0 0.0
    %803 = vmatprep.subr.mxu0 0.0
    %804 = vmatpush1.msra.mxu0 0.0
    %805 = vmatprep.subr.mxu0 0.0
    %806 = vmatpush1.msra.mxu0 0.0
    %807 = vmatprep.subr.mxu0 0.0
    %808 = vmatpush1.msra.mxu0 0.0
    %809 = vmatprep.subr.mxu0 0.0
    %810 = vmatpush1.msra.mxu0 0.0
    %811 = vmatprep.subr.mxu0 0.0
    %812 = vmatpush1.msra.mxu0 0.0
    %813 = vmatprep.subr.mxu0 0.0
    %814 = vmatpush1.msra.mxu0 0.0
    %815 = vmatprep.subr.mxu0 0.0
    %816 = vmatpush1.msra.mxu0 0.0
    %817 = vmatprep.subr.mxu0 0.0
    %818 = vmatpush1.msra.mxu0 0.0
    %819 = vmatprep.subr.mxu0 0.0
    %820 = vmatpush1.msra.mxu0 0.0
    %821 = vmatprep.subr.mxu0 0.0
    %822 = vmatpush1.msra.mxu0 0.0
    %823 = vmatprep.subr.mxu0 0.0
    %824 = vmatpush1.msra.mxu0 0.0
    %825 = vmatprep.subr.mxu0 0.0
    %826 = vmatpush1.msra.mxu0 0.0
    %827 = vmatprep.subr.mxu0 0.0
    %828 = vmatpush1.msra.mxu0 0.0
    %829 = vmatprep.subr.mxu0 0.0
    %830 = vmatpush1.msra.mxu0 0.0
    %831 = vmatprep.subr.mxu0 0.0
    %832 = vmatpush1.msra.mxu0 0.0
    %833 = vmatprep.subr.mxu0 0.0
    %834 = vmatpush1.msra.mxu0 0.0
    %835 = vmatprep.subr.mxu0 0.0
    %836 = vmatpush1.msra.mxu0 0.0
    %837 = vmatprep.subr.mxu0 0.0
    %838 = vmatpush1.msra.mxu0 0.0
    %839 = vmatprep.subr.mxu0 0.0
    %840 = vmatpush1.msra.mxu0 0.0
    %841 = vmatprep.subr.mxu0 0.0
    %842 = vmatpush1.msra.mxu0 0.0
    %843 = vmatprep.subr.mxu0 0.0
    %844 = vmatpush1.msra.mxu0 0.0
    %845 = vmatprep.mubr.f32.mxu0 0.0
    %846 = vmatmul.mubr.f32.gmra.mrb[0].mxu0 %v681
    %v847 = vpop.f32.mrb[0].mxu0
    %v848 = vadd.f32 %v662, %v847
    %v849 = vpop.f32.mrb[0].mxu0
    %v850 = vadd.f32 %v662, %v849
    %851 = vmatprep.mubr.f32.mxu0 0.0
    %852 = vmatmul.mubr.f32.gmra.mrb[0].mxu0 %v684
    %v853 = vpop.f32.mrb[0].mxu0
    %v854 = vadd.f32 %v667, %v853
    %v855 = vpop.f32.mrb[0].mxu0
    %v856 = vadd.f32 %v667, %v855
    %857 = vmatprep.mubr.f32.mxu0 0.0
    %858 = vmatmul.mubr.f32.gmra.mrb[0].mxu0 %v687
    %v859 = vpop.f32.mrb[0].mxu0
    %v860 = vadd.f32 %v672, %v859
    %v861 = vpop.f32.mrb[0].mxu0
    %v862 = vadd.f32 %v672, %v861
    %863 = vmatprep.mubr.f32.mxu0 0.0
    %864 = vmatmul.mubr.f32.gmra.mrb[0].mxu0 %v690
    %v865 = vpop.f32.mrb[0].mxu0
    %v866 = vadd.f32 %v677, %v865
    %v867 = vpop.f32.mrb[0].mxu0
    %v868 = vadd.f32 %v677, %v867
    %869 = vdwg.mxu0
    %870 = vmatprep.subr.mxu0 %v624
    %871 = vmatpush1.msra.mxu0 %v623
    %872 = vmatprep.subr.mxu0 %v632
    %873 = vmatpush1.msra.mxu0 %v631
    %874 = vmatprep.subr.mxu0 %v640
    %875 = vmatpush1.msra.mxu0 %v639
    %876 = vmatprep.subr.mxu0 %v648
    %877 = vmatpush1.msra.mxu0 %v647
    %878 = vmatprep.subr.mxu0 0.0
    %879 = vmatpush1.msra.mxu0 0.0
    %880 = vmatprep.subr.mxu0 0.0
    %881 = vmatpush1.msra.mxu0 0.0
    %882 = vmatprep.subr.mxu0 0.0
    %883 = vmatpush1.msra.mxu0 0.0
    %884 = vmatprep.subr.mxu0 0.0
    %885 = vmatpush1.msra.mxu0 0.0
    %886 = vmatprep.subr.mxu0 0.0
    %887 = vmatpush1.msra.mxu0 0.0
    %888 = vmatprep.subr.mxu0 0.0
    %889 = vmatpush1.msra.mxu0 0.0
    %890 = vmatprep.subr.mxu0 0.0
    %891 = vmatpush1.msra.mxu0 0.0
    %892 = vmatprep.subr.mxu0 0.0
    %893 = vmatpush1.msra.mxu0 0.0
    %894 = vmatprep.subr.mxu0 0.0
    %895 = vmatpush1.msra.mxu0 0.0
    %896 = vmatprep.subr.mxu0 0.0
    %897 = vmatpush1.msra.mxu0 0.0
    %898 = vmatprep.subr.mxu0 0.0
    %899 = vmatpush1.msra.mxu0 0.0
    %900 = vmatprep.subr.mxu0 0.0
    %901 = vmatpush1.msra.mxu0 0.0
    %902 = vmatprep.subr.mxu0 0.0
    %903 = vmatpush1.msra.mxu0 0.0
    %904 = vmatprep.subr.mxu0 0.0
    %905 = vmatpush1.msra.mxu0 0.0
    %906 = vmatprep.subr.mxu0 0.0
    %907 = vmatpush1.msra.mxu0 0.0
    %908 = vmatprep.subr.mxu0 0.0
    %909 = vmatpush1.msra.mxu0 0.0
    %910 = vmatprep.subr.mxu0 0.0
    %911 = vmatpush1.msra.mxu0 0.0
    %912 = vmatprep.subr.mxu0 0.0
    %913 = vmatpush1.msra.mxu0 0.0
    %914 = vmatprep.subr.mxu0 0.0
    %915 = vmatpush1.msra.mxu0 0.0
    %916 = vmatprep.subr.mxu0 0.0
    %917 = vmatpush1.msra.mxu0 0.0
    %918 = vmatprep.subr.mxu0 0.0
    %919 = vmatpush1.msra.mxu0 0.0
    %920 = vmatprep.subr.mxu0 0.0
    %921 = vmatpush1.msra.mxu0 0.0
    %922 = vmatprep.subr.mxu0 0.0
    %923 = vmatpush1.msra.mxu0 0.0
    %924 = vmatprep.subr.mxu0 0.0
    %925 = vmatpush1.msra.mxu0 0.0
    %926 = vmatprep.subr.mxu0 0.0
    %927 = vmatpush1.msra.mxu0 0.0
    %928 = vmatprep.subr.mxu0 0.0
    %929 = vmatpush1.msra.mxu0 0.0
    %930 = vmatprep.subr.mxu0 0.0
    %931 = vmatpush1.msra.mxu0 0.0
    %932 = vmatprep.subr.mxu0 0.0
    %933 = vmatpush1.msra.mxu0 0.0
    %934 = vmatprep.mubr.f32.mxu0 0.0
    %935 = vmatmul.mubr.f32.gmra.mrb[0].mxu0 %v681
    %v936 = vpop.f32.mrb[0].mxu0
    %v937 = vadd.f32 %v662, %v936
    %v938 = vpop.f32.mrb[0].mxu0
    %v939 = vadd.f32 %v662, %v938
    %940 = vmatprep.mubr.f32.mxu0 0.0
    %941 = vmatmul.mubr.f32.gmra.mrb[0].mxu0 %v684
    %v942 = vpop.f32.mrb[0].mxu0
    %v943 = vadd.f32 %v667, %v942
    %v944 = vpop.f32.mrb[0].mxu0
    %v945 = vadd.f32 %v667, %v944
    %946 = vmatprep.mubr.f32.mxu0 0.0
    %947 = vmatmul.mubr.f32.gmra.mrb[0].mxu0 %v687
    %v948 = vpop.f32.mrb[0].mxu0
    %v949 = vadd.f32 %v672, %v948
    %v950 = vpop.f32.mrb[0].mxu0
    %v951 = vadd.f32 %v672, %v950
    %952 = vmatprep.mubr.f32.mxu0 0.0
    %953 = vmatmul.mubr.f32.gmra.mrb[0].mxu0 %v690
    %v954 = vpop.f32.mrb[0].mxu0
    %v955 = vadd.f32 %v677, %v954
    %v956 = vpop.f32.mrb[0].mxu0
    %v957 = vadd.f32 %v677, %v956
    %958 = vdwg.mxu0
    %959 = vmatprep.subr.mxu0 %v626
    %960 = vmatpush1.msra.mxu0 %v625
    %961 = vmatprep.subr.mxu0 %v634
    %962 = vmatpush1.msra.mxu0 %v633
    %963 = vmatprep.subr.mxu0 %v642
    %964 = vmatpush1.msra.mxu0 %v641
    %965 = vmatprep.subr.mxu0 %v650
    %966 = vmatpush1.msra.mxu0 %v649
    %967 = vmatprep.subr.mxu0 0.0
    %968 = vmatpush1.msra.mxu0 0.0
    %969 = vmatprep.subr.mxu0 0.0
    %970 = vmatpush1.msra.mxu0 0.0
    %971 = vmatprep.subr.mxu0 0.0
    %972 = vmatpush1.msra.mxu0 0.0
    %973 = vmatprep.subr.mxu0 0.0
    %974 = vmatpush1.msra.mxu0 0.0
    %975 = vmatprep.subr.mxu0 0.0
    %976 = vmatpush1.msra.mxu0 0.0
    %977 = vmatprep.subr.mxu0 0.0
    %978 = vmatpush1.msra.mxu0 0.0
    %979 = vmatprep.subr.mxu0 0.0
    %980 = vmatpush1.msra.mxu0 0.0
    %981 = vmatprep.subr.mxu0 0.0
    %982 = vmatpush1.msra.mxu0 0.0
    %983 = vmatprep.subr.mxu0 0.0
    %984 = vmatpush1.msra.mxu0 0.0
    %985 = vmatprep.subr.mxu0 0.0
    %986 = vmatpush1.msra.mxu0 0.0
    %987 = vmatprep.subr.mxu0 0.0
    %988 = vmatpush1.msra.mxu0 0.0
    %989 = vmatprep.subr.mxu0 0.0
    %990 = vmatpush1.msra.mxu0 0.0
    %991 = vmatprep.subr.mxu0 0.0
    %992 = vmatpush1.msra.mxu0 0.0
    %993 = vmatprep.subr.mxu0 0.0
    %994 = vmatpush1.msra.mxu0 0.0
    %995 = vmatprep.subr.mxu0 0.0
    %996 = vmatpush1.msra.mxu0 0.0
    %997 = vmatprep.subr.mxu0 0.0
    %998 = vmatpush1.msra.mxu0 0.0
    %999 = vmatprep.subr.mxu0 0.0
    %1000 = vmatpush1.msra.mxu0 0.0
    %1001 = vmatprep.subr.mxu0 0.0
    %1002 = vmatpush1.msra.mxu0 0.0
    %1003 = vmatprep.subr.mxu0 0.0
    %1004 = vmatpush1.msra.mxu0 0.0
    %1005 = vmatprep.subr.mxu0 0.0
    %1006 = vmatpush1.msra.mxu0 0.0
    %1007 = vmatprep.subr.mxu0 0.0
    %1008 = vmatpush1.msra.mxu0 0.0
    %1009 = vmatprep.subr.mxu0 0.0
    %1010 = vmatpush1.msra.mxu0 0.0
    %1011 = vmatprep.subr.mxu0 0.0
    %1012 = vmatpush1.msra.mxu0 0.0
    %1013 = vmatprep.subr.mxu0 0.0
    %1014 = vmatpush1.msra.mxu0 0.0
    %1015 = vmatprep.subr.mxu0 0.0
    %1016 = vmatpush1.msra.mxu0 0.0
    %1017 = vmatprep.subr.mxu0 0.0
    %1018 = vmatpush1.msra.mxu0 0.0
    %1019 = vmatprep.subr.mxu0 0.0
    %1020 = vmatpush1.msra.mxu0 0.0
    %1021 = vmatprep.subr.mxu0 0.0
    %1022 = vmatpush1.msra.mxu0 0.0
    %1023 = vmatprep.mubr.f32.mxu0 0.0
    %1024 = vmatmul.mubr.f32.gmra.mrb[0].mxu0 %v681
    %v1025 = vpop.f32.mrb[0].mxu0
    %v1026 = vadd.f32 %v662, %v1025
    %v1027 = vpop.f32.mrb[0].mxu0
    %v1028 = vadd.f32 %v662, %v1027
    %1029 = vmatprep.mubr.f32.mxu0 0.0
    %1030 = vmatmul.mubr.f32.gmra.mrb[0].mxu0 %v684
    %v1031 = vpop.f32.mrb[0].mxu0
    %v1032 = vadd.f32 %v667, %v1031
    %v1033 = vpop.f32.mrb[0].mxu0
    %v1034 = vadd.f32 %v667, %v1033
    %1035 = vmatprep.mubr.f32.mxu0 0.0
    %1036 = vmatmul.mubr.f32.gmra.mrb[0].mxu0 %v687
    %v1037 = vpop.f32.mrb[0].mxu0
    %v1038 = vadd.f32 %v672, %v1037
    %v1039 = vpop.f32.mrb[0].mxu0
    %v1040 = vadd.f32 %v672, %v1039
    %1041 = vmatprep.mubr.f32.mxu0 0.0
    %1042 = vmatmul.mubr.f32.gmra.mrb[0].mxu0 %v690
    %v1043 = vpop.f32.mrb[0].mxu0
    %v1044 = vadd.f32 %v677, %v1043
    %v1045 = vpop.f32.mrb[0].mxu0
    %v1046 = vadd.f32 %v677, %v1045
    %1047 = vdwg.mxu0
    %v1048 = vtanh.pop %v759
    %v1049 = vtanh.pop %v761
    %v1050 = vtanh.pop %v848
    %v1051 = vtanh.pop %v850
    %v1052 = vtanh.pop %v937
    %v1053 = vtanh.pop %v939
    %v1054 = vtanh.pop %v1026
    %v1055 = vtanh.pop %v1028
    %v1056 = vtanh.pop %v765
    %v1057 = vtanh.pop %v767
    %v1058 = vtanh.pop %v854
    %v1059 = vtanh.pop %v856
    %v1060 = vtanh.pop %v943
    %v1061 = vtanh.pop %v945
    %v1062 = vtanh.pop %v1032
    %v1063 = vtanh.pop %v1034
    %v1064 = vtanh.pop %v771
    %v1065 = vtanh.pop %v773
    %v1066 = vtanh.pop %v860
    %v1067 = vtanh.pop %v862
    %v1068 = vtanh.pop %v949
    %v1069 = vtanh.pop %v951
    %v1070 = vtanh.pop %v1038
    %v1071 = vtanh.pop %v1040
    %v1072 = vtanh.pop %v777
    %v1073 = vtanh.pop %v779
    %v1074 = vtanh.pop %v866
    %v1075 = vtanh.pop %v868
    %v1076 = vtanh.pop %v955
    %v1077 = vtanh.pop %v957
    %v1078 = vtanh.pop %v1044
    %v1079 = vtanh.pop %v1046
    %v1080 = vld [vmem:[%s7] sm:$0xff]
    %v1081 = vld [vmem:[%s7 + $0x8] sm:$0xff]
    %v1082 = vld [vmem:[%s7 + $0x10] sm:$0xff]
    %v1083 = vld [vmem:[%s7 + $0x18] sm:$0xff]
    %v1084 = vld [vmem:[%s8] sm:$0xff]
    %v1085 = vld [vmem:[%s8 + $0x8] sm:$0xff]
    %v1086 = vld [vmem:[%s8 + $0x10] sm:$0xff]
    %v1087 = vld [vmem:[%s8 + $0x18] sm:$0xff]
    %1089 = vset.pattern.permute.xlu0 0
    %1090 = vperm.xlu0 %1089, %v1084
    %v1091 = vpop.permute.xlu0 %1090
    %1094 = vset.pattern.permute.xlu0 0
    %1095 = vperm.xlu0 %1094, %v1085
    %v1096 = vpop.permute.xlu0 %1095
    %1099 = vset.pattern.permute.xlu0 0
    %1100 = vperm.xlu0 %1099, %v1086
    %v1101 = vpop.permute.xlu0 %1100
    %1104 = vset.pattern.permute.xlu0 0
    %1105 = vperm.xlu0 %1104, %v1087
    %v1106 = vpop.permute.xlu0 %1105
    %v1109 = vsel %vm679, %v1080, 0
    %v1112 = vsel %vm679, %v1081, 0
    %v1115 = vsel %vm679, %v1082, 0
    %v1118 = vsel %vm679, %v1083, 0
    %1120 = vmatprep.subr.mxu0 %v1049
    %1121 = vmatpush1.msra.mxu0 %v1048
    %1122 = vmatprep.subr.mxu0 %v1057
    %1123 = vmatpush1.msra.mxu0 %v1056
    %1124 = vmatprep.subr.mxu0 %v1065
    %1125 = vmatpush1.msra.mxu0 %v1064
    %1126 = vmatprep.subr.mxu0 %v1073
    %1127 = vmatpush1.msra.mxu0 %v1072
    %1128 = vmatprep.subr.mxu0 0.0
    %1129 = vmatpush1.msra.mxu0 0.0
    %1130 = vmatprep.subr.mxu0 0.0
    %1131 = vmatpush1.msra.mxu0 0.0
    %1132 = vmatprep.subr.mxu0 0.0
    %1133 = vmatpush1.msra.mxu0 0.0
    %1134 = vmatprep.subr.mxu0 0.0
    %1135 = vmatpush1.msra.mxu0 0.0
    %1136 = vmatprep.subr.mxu0 0.0
    %1137 = vmatpush1.msra.mxu0 0.0
    %1138 = vmatprep.subr.mxu0 0.0
    %1139 = vmatpush1.msra.mxu0 0.0
    %1140 = vmatprep.subr.mxu0 0.0
    %1141 = vmatpush1.msra.mxu0 0.0
    %1142 = vmatprep.subr.mxu0 0.0
    %1143 = vmatpush1.msra.mxu0 0.0
    %1144 = vmatprep.subr.mxu0 0.0
    %1145 = vmatpush1.msra.mxu0 0.0
    %1146 = vmatprep.subr.mxu0 0.0
    %1147 = vmatpush1.msra.mxu0 0.0
    %1148 = vmatprep.subr.mxu0 0.0
    %1149 = vmatpush1.msra.mxu0 0.0
    %1150 = vmatprep.subr.mxu0 0.0
    %1151 = vmatpush1.msra.mxu0 0.0
    %1152 = vmatprep.subr.mxu0 0.0
    %1153 = vmatpush1.msra.mxu0 0.0
    %1154 = vmatprep.subr.mxu0 0.0
    %1155 = vmatpush1.msra.mxu0 0.0
    %1156 = vmatprep.subr.mxu0 0.0
    %1157 = vmatpush1.msra.mxu0 0.0
    %1158 = vmatprep.subr.mxu0 0.0
    %1159 = vmatpush1.msra.mxu0 0.0
    %1160 = vmatprep.subr.mxu0 0.0
    %1161 = vmatpush1.msra.mxu0 0.0
    %1162 = vmatprep.subr.mxu0 0.0
    %1163 = vmatpush1.msra.mxu0 0.0
    %1164 = vmatprep.subr.mxu0 0.0
    %1165 = vmatpush1.msra.mxu0 0.0
    %1166 = vmatprep.subr.mxu0 0.0
    %1167 = vmatpush1.msra.mxu0 0.0
    %1168 = vmatprep.subr.mxu0 0.0
    %1169 = vmatpush1.msra.mxu0 0.0
    %1170 = vmatprep.subr.mxu0 0.0
    %1171 = vmatpush1.msra.mxu0 0.0
    %1172 = vmatprep.subr.mxu0 0.0
    %1173 = vmatpush1.msra.mxu0 0.0
    %1174 = vmatprep.subr.mxu0 0.0
    %1175 = vmatpush1.msra.mxu0 0.0
    %1176 = vmatprep.subr.mxu0 0.0
    %1177 = vmatpush1.msra.mxu0 0.0
    %1178 = vmatprep.subr.mxu0 0.0
    %1179 = vmatpush1.msra.mxu0 0.0
    %1180 = vmatprep.subr.mxu0 0.0
    %1181 = vmatpush1.msra.mxu0 0.0
    %1182 = vmatprep.subr.mxu0 0.0
    %1183 = vmatpush1.msra.mxu0 0.0
    %1184 = vmatprep.mubr.f32.mxu0 0.0
    %1185 = vmatmul.mubr.f32.gmra.mrb[0].mxu0 %v1109
    %v1186 = vpop.f32.mrb[0].mxu0
    %v1187 = vadd.f32 %v1091, %v1186
    %v1188 = vpop.f32.mrb[0].mxu0
    %v1189 = vadd.f32 %v1091, %v1188
    %1190 = vmatprep.mubr.f32.mxu0 0.0
    %1191 = vmatmul.mubr.f32.gmra.mrb[0].mxu0 %v1112
    %v1192 = vpop.f32.mrb[0].mxu0
    %v1193 = vadd.f32 %v1096, %v1192
    %v1194 = vpop.f32.mrb[0].mxu0
    %v1195 = vadd.f32 %v1096, %v1194
    %1196 = vmatprep.mubr.f32.mxu0 0.0
    %1197 = vmatmul.mubr.f32.gmra.mrb[0].mxu0 %v1115
    %v1198 = vpop.f32.mrb[0].mxu0
    %v1199 = vadd.f32 %v1101, %v1198
    %v1200 = vpop.f32.mrb[0].mxu0
    %v1201 = vadd.f32 %v1101, %v1200
    %1202 = vmatprep.mubr.f32.mxu0 0.0
    %1203 = vmatmul.mubr.f32.gmra.mrb[0].mxu0 %v1118
    %v1204 = vpop.f32.mrb[0].mxu0
    %v1205 = vadd.f32 %v1106, %v1204
    %v1206 = vpop.f32.mrb[0].mxu0
    %v1207 = vadd.f32 %v1106, %v1206
    %1208 = vdwg.mxu0
    %1209 = vmatprep.subr.mxu0 %v1051
    %1210 = vmatpush1.msra.mxu0 %v1050
    %1211 = vmatprep.subr.mxu0 %v1059
    %1212 = vmatpush1.msra.mxu0 %v1058
    %1213 = vmatprep.subr.mxu0 %v1067
    %1214 = vmatpush1.msra.mxu0 %v1066
    %1215 = vmatprep.subr.mxu0 %v1075
    %1216 = vmatpush1.msra.mxu0 %v1074
    %1217 = vmatprep.subr.mxu0 0.0
    %1218 = vmatpush1.msra.mxu0 0.0
    %1219 = vmatprep.subr.mxu0 0.0
    %1220 = vmatpush1.msra.mxu0 0.0
    %1221 = vmatprep.subr.mxu0 0.0
    %1222 = vmatpush1.msra.mxu0 0.0
    %1223 = vmatprep.subr.mxu0 0.0
    %1224 = vmatpush1.msra.mxu0 0.0
    %1225 = vmatprep.subr.mxu0 0.0
    %1226 = vmatpush1.msra.mxu0 0.0
    %1227 = vmatprep.subr.mxu0 0.0
    %1228 = vmatpush1.msra.mxu0 0.0
    %1229 = vmatprep.subr.mxu0 0.0
    %1230 = vmatpush1.msra.mxu0 0.0
    %1231 = vmatprep.subr.mxu0 0.0
    %1232 = vmatpush1.msra.mxu0 0.0
    %1233 = vmatprep.subr.mxu0 0.0
    %1234 = vmatpush1.msra.mxu0 0.0
    %1235 = vmatprep.subr.mxu0 0.0
    %1236 = vmatpush1.msra.mxu0 0.0
    %1237 = vmatprep.subr.mxu0 0.0
    %1238 = vmatpush1.msra.mxu0 0.0
    %1239 = vmatprep.subr.mxu0 0.0
    %1240 = vmatpush1.msra.mxu0 0.0
    %1241 = vmatprep.subr.mxu0 0.0
    %1242 = vmatpush1.msra.mxu0 0.0
    %1243 = vmatprep.subr.mxu0 0.0
    %1244 = vmatpush1.msra.mxu0 0.0
    %1245 = vmatprep.subr.mxu0 0.0
    %1246 = vmatpush1.msra.mxu0 0.0
    %1247 = vmatprep.subr.mxu0 0.0
    %1248 = vmatpush1.msra.mxu0 0.0
    %1249 = vmatprep.subr.mxu0 0.0
    %1250 = vmatpush1.msra.mxu0 0.0
    %1251 = vmatprep.subr.mxu0 0.0
    %1252 = vmatpush1.msra.mxu0 0.0
    %1253 = vmatprep.subr.mxu0 0.0
    %1254 = vmatpush1.msra.mxu0 0.0
    %1255 = vmatprep.subr.mxu0 0.0
    %1256 = vmatpush1.msra.mxu0 0.0
    %1257 = vmatprep.subr.mxu0 0.0
    %1258 = vmatpush1.msra.mxu0 0.0
    %1259 = vmatprep.subr.mxu0 0.0
    %1260 = vmatpush1.msra.mxu0 0.0
    %1261 = vmatprep.subr.mxu0 0.0
    %1262 = vmatpush1.msra.mxu0 0.0
    %1263 = vmatprep.subr.mxu0 0.0
    %1264 = vmatpush1.msra.mxu0 0.0
    %1265 = vmatprep.subr.mxu0 0.0
    %1266 = vmatpush1.msra.mxu0 0.0
    %1267 = vmatprep.subr.mxu0 0.0
    %1268 = vmatpush1.msra.mxu0 0.0
    %1269 = vmatprep.subr.mxu0 0.0
    %1270 = vmatpush1.msra.mxu0 0.0
    %1271 = vmatprep.subr.mxu0 0.0
    %1272 = vmatpush1.msra.mxu0 0.0
    %1273 = vmatprep.mubr.f32.mxu0 0.0
    %1274 = vmatmul.mubr.f32.gmra.mrb[0].mxu0 %v1109
    %v1275 = vpop.f32.mrb[0].mxu0
    %v1276 = vadd.f32 %v1091, %v1275
    %v1277 = vpop.f32.mrb[0].mxu0
    %v1278 = vadd.f32 %v1091, %v1277
    %1279 = vmatprep.mubr.f32.mxu0 0.0
    %1280 = vmatmul.mubr.f32.gmra.mrb[0].mxu0 %v1112
    %v1281 = vpop.f32.mrb[0].mxu0
    %v1282 = vadd.f32 %v1096, %v1281
    %v1283 = vpop.f32.mrb[0].mxu0
    %v1284 = vadd.f32 %v1096, %v1283
    %1285 = vmatprep.mubr.f32.mxu0 0.0
    %1286 = vmatmul.mubr.f32.gmra.mrb[0].mxu0 %v1115
    %v1287 = vpop.f32.mrb[0].mxu0
    %v1288 = vadd.f32 %v1101, %v1287
    %v1289 = vpop.f32.mrb[0].mxu0
    %v1290 = vadd.f32 %v1101, %v1289
    %1291 = vmatprep.mubr.f32.mxu0 0.0
    %1292 = vmatmul.mubr.f32.gmra.mrb[0].mxu0 %v1118
    %v1293 = vpop.f32.mrb[0].mxu0
    %v1294 = vadd.f32 %v1106, %v1293
    %v1295 = vpop.f32.mrb[0].mxu0
    %v1296 = vadd.f32 %v1106, %v1295
    %1297 = vdwg.mxu0
    %1298 = vmatprep.subr.mxu0 %v1053
    %1299 = vmatpush1.msra.mxu0 %v1052
    %1300 = vmatprep.subr.mxu0 %v1061
    %1301 = vmatpush1.msra.mxu0 %v1060
    %1302 = vmatprep.subr.mxu0 %v1069
    %1303 = vmatpush1.msra.mxu0 %v1068
    %1304 = vmatprep.subr.mxu0 %v1077
    %1305 = vmatpush1.msra.mxu0 %v1076
    %1306 = vmatprep.subr.mxu0 0.0
    %1307 = vmatpush1.msra.mxu0 0.0
    %1308 = vmatprep.subr.mxu0 0.0
    %1309 = vmatpush1.msra.mxu0 0.0
    %1310 = vmatprep.subr.mxu0 0.0
    %1311 = vmatpush1.msra.mxu0 0.0
    %1312 = vmatprep.subr.mxu0 0.0
    %1313 = vmatpush1.msra.mxu0 0.0
    %1314 = vmatprep.subr.mxu0 0.0
    %1315 = vmatpush1.msra.mxu0 0.0
    %1316 = vmatprep.subr.mxu0 0.0
    %1317 = vmatpush1.msra.mxu0 0.0
    %1318 = vmatprep.subr.mxu0 0.0
    %1319 = vmatpush1.msra.mxu0 0.0
    %1320 = vmatprep.subr.mxu0 0.0
    %1321 = vmatpush1.msra.mxu0 0.0
    %1322 = vmatprep.subr.mxu0 0.0
    %1323 = vmatpush1.msra.mxu0 0.0
    %1324 = vmatprep.subr.mxu0 0.0
    %1325 = vmatpush1.msra.mxu0 0.0
    %1326 = vmatprep.subr.mxu0 0.0
    %1327 = vmatpush1.msra.mxu0 0.0
    %1328 = vmatprep.subr.mxu0 0.0
    %1329 = vmatpush1.msra.mxu0 0.0
    %1330 = vmatprep.subr.mxu0 0.0
    %1331 = vmatpush1.msra.mxu0 0.0
    %1332 = vmatprep.subr.mxu0 0.0
    %1333 = vmatpush1.msra.mxu0 0.0
    %1334 = vmatprep.subr.mxu0 0.0
    %1335 = vmatpush1.msra.mxu0 0.0
    %1336 = vmatprep.subr.mxu0 0.0
    %1337 = vmatpush1.msra.mxu0 0.0
    %1338 = vmatprep.subr.mxu0 0.0
    %1339 = vmatpush1.msra.mxu0 0.0
    %1340 = vmatprep.subr.mxu0 0.0
    %1341 = vmatpush1.msra.mxu0 0.0
    %1342 = vmatprep.subr.mxu0 0.0
    %1343 = vmatpush1.msra.mxu0 0.0
    %1344 = vmatprep.subr.mxu0 0.0
    %1345 = vmatpush1.msra.mxu0 0.0
    %1346 = vmatprep.subr.mxu0 0.0
    %1347 = vmatpush1.msra.mxu0 0.0
    %1348 = vmatprep.subr.mxu0 0.0
    %1349 = vmatpush1.msra.mxu0 0.0
    %1350 = vmatprep.subr.mxu0 0.0
    %1351 = vmatpush1.msra.mxu0 0.0
    %1352 = vmatprep.subr.mxu0 0.0
    %1353 = vmatpush1.msra.mxu0 0.0
    %1354 = vmatprep.subr.mxu0 0.0
    %1355 = vmatpush1.msra.mxu0 0.0
    %1356 = vmatprep.subr.mxu0 0.0
    %1357 = vmatpush1.msra.mxu0 0.0
    %1358 = vmatprep.subr.mxu0 0.0
    %1359 = vmatpush1.msra.mxu0 0.0
    %1360 = vmatprep.subr.mxu0 0.0
    %1361 = vmatpush1.msra.mxu0 0.0
    %1362 = vmatprep.mubr.f32.mxu0 0.0
    %1363 = vmatmul.mubr.f32.gmra.mrb[0].mxu0 %v1109
    %v1364 = vpop.f32.mrb[0].mxu0
    %v1365 = vadd.f32 %v1091, %v1364
    %v1366 = vpop.f32.mrb[0].mxu0
    %v1367 = vadd.f32 %v1091, %v1366
    %1368 = vmatprep.mubr.f32.mxu0 0.0
    %1369 = vmatmul.mubr.f32.gmra.mrb[0].mxu0 %v1112
    %v1370 = vpop.f32.mrb[0].mxu0
    %v1371 = vadd.f32 %v1096, %v1370
    %v1372 = vpop.f32.mrb[0].mxu0
    %v1373 = vadd.f32 %v1096, %v1372
    %1374 = vmatprep.mubr.f32.mxu0 0.0
    %1375 = vmatmul.mubr.f32.gmra.mrb[0].mxu0 %v1115
    %v1376 = vpop.f32.mrb[0].mxu0
    %v1377 = vadd.f32 %v1101, %v1376
    %v1378 = vpop.f32.mrb[0].mxu0
    %v1379 = vadd.f32 %v1101, %v1378
    %1380 = vmatprep.mubr.f32.mxu0 0.0
    %1381 = vmatmul.mubr.f32.gmra.mrb[0].mxu0 %v1118
    %v1382 = vpop.f32.mrb[0].mxu0
    %v1383 = vadd.f32 %v1106, %v1382
    %v1384 = vpop.f32.mrb[0].mxu0
    %v1385 = vadd.f32 %v1106, %v1384
    %1386 = vdwg.mxu0
    %1387 = vmatprep.subr.mxu0 %v1055
    %1388 = vmatpush1.msra.mxu0 %v1054
    %1389 = vmatprep.subr.mxu0 %v1063
    %1390 = vmatpush1.msra.mxu0 %v1062
    %1391 = vmatprep.subr.mxu0 %v1071
    %1392 = vmatpush1.msra.mxu0 %v1070
    %1393 = vmatprep.subr.mxu0 %v1079
    %1394 = vmatpush1.msra.mxu0 %v1078
    %1395 = vmatprep.subr.mxu0 0.0
    %1396 = vmatpush1.msra.mxu0 0.0
    %1397 = vmatprep.subr.mxu0 0.0
    %1398 = vmatpush1.msra.mxu0 0.0
    %1399 = vmatprep.subr.mxu0 0.0
    %1400 = vmatpush1.msra.mxu0 0.0
    %1401 = vmatprep.subr.mxu0 0.0
    %1402 = vmatpush1.msra.mxu0 0.0
    %1403 = vmatprep.subr.mxu0 0.0
    %1404 = vmatpush1.msra.mxu0 0.0
    %1405 = vmatprep.subr.mxu0 0.0
    %1406 = vmatpush1.msra.mxu0 0.0
    %1407 = vmatprep.subr.mxu0 0.0
    %1408 = vmatpush1.msra.mxu0 0.0
    %1409 = vmatprep.subr.mxu0 0.0
    %1410 = vmatpush1.msra.mxu0 0.0
    %1411 = vmatprep.subr.mxu0 0.0
    %1412 = vmatpush1.msra.mxu0 0.0
    %1413 = vmatprep.subr.mxu0 0.0
    %1414 = vmatpush1.msra.mxu0 0.0
    %1415 = vmatprep.subr.mxu0 0.0
    %1416 = vmatpush1.msra.mxu0 0.0
    %1417 = vmatprep.subr.mxu0 0.0
    %1418 = vmatpush1.msra.mxu0 0.0
    %1419 = vmatprep.subr.mxu0 0.0
    %1420 = vmatpush1.msra.mxu0 0.0
    %1421 = vmatprep.subr.mxu0 0.0
    %1422 = vmatpush1.msra.mxu0 0.0
    %1423 = vmatprep.subr.mxu0 0.0
    %1424 = vmatpush1.msra.mxu0 0.0
    %1425 = vmatprep.subr.mxu0 0.0
    %1426 = vmatpush1.msra.mxu0 0.0
    %1427 = vmatprep.subr.mxu0 0.0
    %1428 = vmatpush1.msra.mxu0 0.0
    %1429 = vmatprep.subr.mxu0 0.0
    %1430 = vmatpush1.msra.mxu0 0.0
    %1431 = vmatprep.subr.mxu0 0.0
    %1432 = vmatpush1.msra.mxu0 0.0
    %1433 = vmatprep.subr.mxu0 0.0
    %1434 = vmatpush1.msra.mxu0 0.0
    %1435 = vmatprep.subr.mxu0 0.0
    %1436 = vmatpush1.msra.mxu0 0.0
    %1437 = vmatprep.subr.mxu0 0.0
    %1438 = vmatpush1.msra.mxu0 0.0
    %1439 = vmatprep.subr.mxu0 0.0
    %1440 = vmatpush1.msra.mxu0 0.0
    %1441 = vmatprep.subr.mxu0 0.0
    %1442 = vmatpush1.msra.mxu0 0.0
    %1443 = vmatprep.subr.mxu0 0.0
    %1444 = vmatpush1.msra.mxu0 0.0
    %1445 = vmatprep.subr.mxu0 0.0
    %1446 = vmatpush1.msra.mxu0 0.0
    %1447 = vmatprep.subr.mxu0 0.0
    %1448 = vmatpush1.msra.mxu0 0.0
    %1449 = vmatprep.subr.mxu0 0.0
    %1450 = vmatpush1.msra.mxu0 0.0
    %1451 = vmatprep.mubr.f32.mxu0 0.0
    %1452 = vmatmul.mubr.f32.gmra.mrb[0].mxu0 %v1109
    %v1453 = vpop.f32.mrb[0].mxu0
    %v1454 = vadd.f32 %v1091, %v1453
    %v1455 = vpop.f32.mrb[0].mxu0
    %v1456 = vadd.f32 %v1091, %v1455
    %1457 = vmatprep.mubr.f32.mxu0 0.0
    %1458 = vmatmul.mubr.f32.gmra.mrb[0].mxu0 %v1112
    %v1459 = vpop.f32.mrb[0].mxu0
    %v1460 = vadd.f32 %v1096, %v1459
    %v1461 = vpop.f32.mrb[0].mxu0
    %v1462 = vadd.f32 %v1096, %v1461
    %1463 = vmatprep.mubr.f32.mxu0 0.0
    %1464 = vmatmul.mubr.f32.gmra.mrb[0].mxu0 %v1115
    %v1465 = vpop.f32.mrb[0].mxu0
    %v1466 = vadd.f32 %v1101, %v1465
    %v1467 = vpop.f32.mrb[0].mxu0
    %v1468 = vadd.f32 %v1101, %v1467
    %1469 = vmatprep.mubr.f32.mxu0 0.0
    %1470 = vmatmul.mubr.f32.gmra.mrb[0].mxu0 %v1118
    %v1471 = vpop.f32.mrb[0].mxu0
    %v1472 = vadd.f32 %v1106, %v1471
    %v1473 = vpop.f32.mrb[0].mxu0
    %v1474 = vadd.f32 %v1106, %v1473
    %1475 = vdwg.mxu0
    %v1476 = vtanh.pop %v1187
    %v1477 = vtanh.pop %v1189
    %v1478 = vtanh.pop %v1276
    %v1479 = vtanh.pop %v1278
    %v1480 = vtanh.pop %v1365
    %v1481 = vtanh.pop %v1367
    %v1482 = vtanh.pop %v1454
    %v1483 = vtanh.pop %v1456
    %v1484 = vtanh.pop %v1193
    %v1485 = vtanh.pop %v1195
    %v1486 = vtanh.pop %v1282
    %v1487 = vtanh.pop %v1284
    %v1488 = vtanh.pop %v1371
    %v1489 = vtanh.pop %v1373
    %v1490 = vtanh.pop %v1460
    %v1491 = vtanh.pop %v1462
    %v1492 = vtanh.pop %v1199
    %v1493 = vtanh.pop %v1201
    %v1494 = vtanh.pop %v1288
    %v1495 = vtanh.pop %v1290
    %v1496 = vtanh.pop %v1377
    %v1497 = vtanh.pop %v1379
    %v1498 = vtanh.pop %v1466
    %v1499 = vtanh.pop %v1468
    %v1500 = vtanh.pop %v1205
    %v1501 = vtanh.pop %v1207
    %v1502 = vtanh.pop %v1294
    %v1503 = vtanh.pop %v1296
    %v1504 = vtanh.pop %v1383
    %v1505 = vtanh.pop %v1385
    %v1506 = vtanh.pop %v1472
    %v1507 = vtanh.pop %v1474
    %v1508 = vld [vmem:[%s9] sm:$0xf]
    %v1509 = vld [vmem:[%s10] sm:$0xf]
    %1511 = vset.pattern.permute.xlu0 0
    %1512 = vperm.xlu0 %1511, %v1509
    %v1513 = vpop.permute.xlu0 %1512
    %v1516 = vsel %vm679, %v1508, 0
    %1518 = vmatprep.subr.mxu0 %v1477
    %1519 = vmatpush1.msra.mxu0 %v1476
    %1520 = vmatprep.subr.mxu0 %v1485
    %1521 = vmatpush1.msra.mxu0 %v1484
    %1522 = vmatprep.subr.mxu0 %v1493
    %1523 = vmatpush1.msra.mxu0 %v1492
    %1524 = vmatprep.subr.mxu0 %v1501
    %1525 = vmatpush1.msra.mxu0 %v1500
    %1526 = vmatprep.subr.mxu0 0.0
    %1527 = vmatpush1.msra.mxu0 0.0
    %1528 = vmatprep.subr.mxu0 0.0
    %1529 = vmatpush1.msra.mxu0 0.0
    %1530 = vmatprep.subr.mxu0 0.0
    %1531 = vmatpush1.msra.mxu0 0.0
    %1532 = vmatprep.subr.mxu0 0.0
    %1533 = vmatpush1.msra.mxu0 0.0
    %1534 = vmatprep.subr.mxu0 0.0
    %1535 = vmatpush1.msra.mxu0 0.0
    %1536 = vmatprep.subr.mxu0 0.0
    %1537 = vmatpush1.msra.mxu0 0.0
    %1538 = vmatprep.subr.mxu0 0.0
    %1539 = vmatpush1.msra.mxu0 0.0
    %1540 = vmatprep.subr.mxu0 0.0
    %1541 = vmatpush1.msra.mxu0 0.0
    %1542 = vmatprep.subr.mxu0 0.0
    %1543 = vmatpush1.msra.mxu0 0.0
    %1544 = vmatprep.subr.mxu0 0.0
    %1545 = vmatpush1.msra.mxu0 0.0
    %1546 = vmatprep.subr.mxu0 0.0
    %1547 = vmatpush1.msra.mxu0 0.0
    %1548 = vmatprep.subr.mxu0 0.0
    %1549 = vmatpush1.msra.mxu0 0.0
    %1550 = vmatprep.subr.mxu0 0.0
    %1551 = vmatpush1.msra.mxu0 0.0
    %1552 = vmatprep.subr.mxu0 0.0
    %1553 = vmatpush1.msra.mxu0 0.0
    %1554 = vmatprep.subr.mxu0 0.0
    %1555 = vmatpush1.msra.mxu0 0.0
    %1556 = vmatprep.subr.mxu0 0.0
    %1557 = vmatpush1.msra.mxu0 0.0
    %1558 = vmatprep.subr.mxu0 0.0
    %1559 = vmatpush1.msra.mxu0 0.0
    %1560 = vmatprep.subr.mxu0 0.0
    %1561 = vmatpush1.msra.mxu0 0.0
    %1562 = vmatprep.subr.mxu0 0.0
    %1563 = vmatpush1.msra.mxu0 0.0
    %1564 = vmatprep.subr.mxu0 0.0
    %1565 = vmatpush1.msra.mxu0 0.0
    %1566 = vmatprep.subr.mxu0 0.0
    %1567 = vmatpush1.msra.mxu0 0.0
    %1568 = vmatprep.subr.mxu0 0.0
    %1569 = vmatpush1.msra.mxu0 0.0
    %1570 = vmatprep.subr.mxu0 0.0
    %1571 = vmatpush1.msra.mxu0 0.0
    %1572 = vmatprep.subr.mxu0 0.0
    %1573 = vmatpush1.msra.mxu0 0.0
    %1574 = vmatprep.subr.mxu0 0.0
    %1575 = vmatpush1.msra.mxu0 0.0
    %1576 = vmatprep.subr.mxu0 0.0
    %1577 = vmatpush1.msra.mxu0 0.0
    %1578 = vmatprep.subr.mxu0 0.0
    %1579 = vmatpush1.msra.mxu0 0.0
    %1580 = vmatprep.subr.mxu0 0.0
    %1581 = vmatpush1.msra.mxu0 0.0
    %1582 = vmatprep.mubr.f32.mxu0 0.0
    %1583 = vmatmul.mubr.f32.gmra.mrb[0].mxu0 %v1516
    %v1584 = vpop.f32.mrb[0].mxu0
    %v1585 = vadd.f32 %v1513, %v1584
    %v1586 = vpop.f32.mrb[0].mxu0
    %v1587 = vadd.f32 %v1513, %v1586
    %1588 = vdwg.mxu0
    %1589 = vmatprep.subr.mxu0 %v1479
    %1590 = vmatpush1.msra.mxu0 %v1478
    %1591 = vmatprep.subr.mxu0 %v1487
    %1592 = vmatpush1.msra.mxu0 %v1486
    %1593 = vmatprep.subr.mxu0 %v1495
    %1594 = vmatpush1.msra.mxu0 %v1494
    %1595 = vmatprep.subr.mxu0 %v1503
    %1596 = vmatpush1.msra.mxu0 %v1502
    %1597 = vmatprep.subr.mxu0 0.0
    %1598 = vmatpush1.msra.mxu0 0.0
    %1599 = vmatprep.subr.mxu0 0.0
    %1600 = vmatpush1.msra.mxu0 0.0
    %1601 = vmatprep.subr.mxu0 0.0
    %1602 = vmatpush1.msra.mxu0 0.0
    %1603 = vmatprep.subr.mxu0 0.0
    %1604 = vmatpush1.msra.mxu0 0.0
    %1605 = vmatprep.subr.mxu0 0.0
    %1606 = vmatpush1.msra.mxu0 0.0
    %1607 = vmatprep.subr.mxu0 0.0
    %1608 = vmatpush1.msra.mxu0 0.0
    %1609 = vmatprep.subr.mxu0 0.0
    %1610 = vmatpush1.msra.mxu0 0.0
    %1611 = vmatprep.subr.mxu0 0.0
    %1612 = vmatpush1.msra.mxu0 0.0
    %1613 = vmatprep.subr.mxu0 0.0
    %1614 = vmatpush1.msra.mxu0 0.0
    %1615 = vmatprep.subr.mxu0 0.0
    %1616 = vmatpush1.msra.mxu0 0.0
    %1617 = vmatprep.subr.mxu0 0.0
    %1618 = vmatpush1.msra.mxu0 0.0
    %1619 = vmatprep.subr.mxu0 0.0
    %1620 = vmatpush1.msra.mxu0 0.0
    %1621 = vmatprep.subr.mxu0 0.0
    %1622 = vmatpush1.msra.mxu0 0.0
    %1623 = vmatprep.subr.mxu0 0.0
    %1624 = vmatpush1.msra.mxu0 0.0
    %1625 = vmatprep.subr.mxu0 0.0
    %1626 = vmatpush1.msra.mxu0 0.0
    %1627 = vmatprep.subr.mxu0 0.0
    %1628 = vmatpush1.msra.mxu0 0.0
    %1629 = vmatprep.subr.mxu0 0.0
    %1630 = vmatpush1.msra.mxu0 0.0
    %1631 = vmatprep.subr.mxu0 0.0
    %1632 = vmatpush1.msra.mxu0 0.0
    %1633 = vmatprep.subr.mxu0 0.0
    %1634 = vmatpush1.msra.mxu0 0.0
    %1635 = vmatprep.subr.mxu0 0.0
    %1636 = vmatpush1.msra.mxu0 0.0
    %1637 = vmatprep.subr.mxu0 0.0
    %1638 = vmatpush1.msra.mxu0 0.0
    %1639 = vmatprep.subr.mxu0 0.0
    %1640 = vmatpush1.msra.mxu0 0.0
    %1641 = vmatprep.subr.mxu0 0.0
    %1642 = vmatpush1.msra.mxu0 0.0
    %1643 = vmatprep.subr.mxu0 0.0
    %1644 = vmatpush1.msra.mxu0 0.0
    %1645 = vmatprep.subr.mxu0 0.0
    %1646 = vmatpush1.msra.mxu0 0.0
    %1647 = vmatprep.subr.mxu0 0.0
    %1648 = vmatpush1.msra.mxu0 0.0
    %1649 = vmatprep.subr.mxu0 0.0
    %1650 = vmatpush1.msra.mxu0 0.0
    %1651 = vmatprep.subr.mxu0 0.0
    %1652 = vmatpush1.msra.mxu0 0.0
    %1653 = vmatprep.mubr.f32.mxu0 0.0
    %1654 = vmatmul.mubr.f32.gmra.mrb[0].mxu0 %v1516
    %v1655 = vpop.f32.mrb[0].mxu0
    %v1656 = vadd.f32 %v1513, %v1655
    %v1657 = vpop.f32.mrb[0].mxu0
    %v1658 = vadd.f32 %v1513, %v1657
    %1659 = vdwg.mxu0
    %1660 = vmatprep.subr.mxu0 %v1481
    %1661 = vmatpush1.msra.mxu0 %v1480
    %1662 = vmatprep.subr.mxu0 %v1489
    %1663 = vmatpush1.msra.mxu0 %v1488
    %1664 = vmatprep.subr.mxu0 %v1497
    %1665 = vmatpush1.msra.mxu0 %v1496
    %1666 = vmatprep.subr.mxu0 %v1505
    %1667 = vmatpush1.msra.mxu0 %v1504
    %1668 = vmatprep.subr.mxu0 0.0
    %1669 = vmatpush1.msra.mxu0 0.0
    %1670 = vmatprep.subr.mxu0 0.0
    %1671 = vmatpush1.msra.mxu0 0.0
    %1672 = vmatprep.subr.mxu0 0.0
    %1673 = vmatpush1.msra.mxu0 0.0
    %1674 = vmatprep.subr.mxu0 0.0
    %1675 = vmatpush1.msra.mxu0 0.0
    %1676 = vmatprep.subr.mxu0 0.0
    %1677 = vmatpush1.msra.mxu0 0.0
    %1678 = vmatprep.subr.mxu0 0.0
    %1679 = vmatpush1.msra.mxu0 0.0
    %1680 = vmatprep.subr.mxu0 0.0
    %1681 = vmatpush1.msra.mxu0 0.0
    %1682 = vmatprep.subr.mxu0 0.0
    %1683 = vmatpush1.msra.mxu0 0.0
    %1684 = vmatprep.subr.mxu0 0.0
    %1685 = vmatpush1.msra.mxu0 0.0
    %1686 = vmatprep.subr.mxu0 0.0
    %1687 = vmatpush1.msra.mxu0 0.0
    %1688 = vmatprep.subr.mxu0 0.0
    %1689 = vmatpush1.msra.mxu0 0.0
    %1690 = vmatprep.subr.mxu0 0.0
    %1691 = vmatpush1.msra.mxu0 0.0
    %1692 = vmatprep.subr.mxu0 0.0
    %1693 = vmatpush1.msra.mxu0 0.0
    %1694 = vmatprep.subr.mxu0 0.0
    %1695 = vmatpush1.msra.mxu0 0.0
    %1696 = vmatprep.subr.mxu0 0.0
    %1697 = vmatpush1.msra.mxu0 0.0
    %1698 = vmatprep.subr.mxu0 0.0
    %1699 = vmatpush1.msra.mxu0 0.0
    %1700 = vmatprep.subr.mxu0 0.0
    %1701 = vmatpush1.msra.mxu0 0.0
    %1702 = vmatprep.subr.mxu0 0.0
    %1703 = vmatpush1.msra.mxu0 0.0
    %1704 = vmatprep.subr.mxu0 0.0
    %1705 = vmatpush1.msra.mxu0 0.0
    %1706 = vmatprep.subr.mxu0 0.0
    %1707 = vmatpush1.msra.mxu0 0.0
    %1708 = vmatprep.subr.mxu0 0.0
    %1709 = vmatpush1.msra.mxu0 0.0
    %1710 = vmatprep.subr.mxu0 0.0
    %1711 = vmatpush1.msra.mxu0 0.0
    %1712 = vmatprep.subr.mxu0 0.0
    %1713 = vmatpush1.msra.mxu0 0.0
    %1714 = vmatprep.subr.mxu0 0.0
    %1715 = vmatpush1.msra.mxu0 0.0
    %1716 = vmatprep.subr.mxu0 0.0
    %1717 = vmatpush1.msra.mxu0 0.0
    %1718 = vmatprep.subr.mxu0 0.0
    %1719 = vmatpush1.msra.mxu0 0.0
    %1720 = vmatprep.subr.mxu0 0.0
    %1721 = vmatpush1.msra.mxu0 0.0
    %1722 = vmatprep.subr.mxu0 0.0
    %1723 = vmatpush1.msra.mxu0 0.0
    %1724 = vmatprep.mubr.f32.mxu0 0.0
    %1725 = vmatmul.mubr.f32.gmra.mrb[0].mxu0 %v1516
    %v1726 = vpop.f32.mrb[0].mxu0
    %v1727 = vadd.f32 %v1513, %v1726
    %v1728 = vpop.f32.mrb[0].mxu0
    %v1729 = vadd.f32 %v1513, %v1728
    %1730 = vdwg.mxu0
    %1731 = vmatprep.subr.mxu0 %v1483
    %1732 = vmatpush1.msra.mxu0 %v1482
    %1733 = vmatprep.subr.mxu0 %v1491
    %1734 = vmatpush1.msra.mxu0 %v1490
    %1735 = vmatprep.subr.mxu0 %v1499
    %1736 = vmatpush1.msra.mxu0 %v1498
    %1737 = vmatprep.subr.mxu0 %v1507
    %1738 = vmatpush1.msra.mxu0 %v1506
    %1739 = vmatprep.subr.mxu0 0.0
    %1740 = vmatpush1.msra.mxu0 0.0
    %1741 = vmatprep.subr.mxu0 0.0
    %1742 = vmatpush1.msra.mxu0 0.0
    %1743 = vmatprep.subr.mxu0 0.0
    %1744 = vmatpush1.msra.mxu0 0.0
    %1745 = vmatprep.subr.mxu0 0.0
    %1746 = vmatpush1.msra.mxu0 0.0
    %1747 = vmatprep.subr.mxu0 0.0
    %1748 = vmatpush1.msra.mxu0 0.0
    %1749 = vmatprep.subr.mxu0 0.0
    %1750 = vmatpush1.msra.mxu0 0.0
    %1751 = vmatprep.subr.mxu0 0.0
    %1752 = vmatpush1.msra.mxu0 0.0
    %1753 = vmatprep.subr.mxu0 0.0
    %1754 = vmatpush1.msra.mxu0 0.0
    %1755 = vmatprep.subr.mxu0 0.0
    %1756 = vmatpush1.msra.mxu0 0.0
    %1757 = vmatprep.subr.mxu0 0.0
    %1758 = vmatpush1.msra.mxu0 0.0
    %1759 = vmatprep.subr.mxu0 0.0
    %1760 = vmatpush1.msra.mxu0 0.0
    %1761 = vmatprep.subr.mxu0 0.0
    %1762 = vmatpush1.msra.mxu0 0.0
    %1763 = vmatprep.subr.mxu0 0.0
    %1764 = vmatpush1.msra.mxu0 0.0
    %1765 = vmatprep.subr.mxu0 0.0
    %1766 = vmatpush1.msra.mxu0 0.0
    %1767 = vmatprep.subr.mxu0 0.0
    %1768 = vmatpush1.msra.mxu0 0.0
    %1769 = vmatprep.subr.mxu0 0.0
    %1770 = vmatpush1.msra.mxu0 0.0
    %1771 = vmatprep.subr.mxu0 0.0
    %1772 = vmatpush1.msra.mxu0 0.0
    %1773 = vmatprep.subr.mxu0 0.0
    %1774 = vmatpush1.msra.mxu0 0.0
    %1775 = vmatprep.subr.mxu0 0.0
    %1776 = vmatpush1.msra.mxu0 0.0
    %1777 = vmatprep.subr.mxu0 0.0
    %1778 = vmatpush1.msra.mxu0 0.0
    %1779 = vmatprep.subr.mxu0 0.0
    %1780 = vmatpush1.msra.mxu0 0.0
    %1781 = vmatprep.subr.mxu0 0.0
    %1782 = vmatpush1.msra.mxu0 0.0
    %1783 = vmatprep.subr.mxu0 0.0
    %1784 = vmatpush1.msra.mxu0 0.0
    %1785 = vmatprep.subr.mxu0 0.0
    %1786 = vmatpush1.msra.mxu0 0.0
    %1787 = vmatprep.subr.mxu0 0.0
    %1788 = vmatpush1.msra.mxu0 0.0
    %1789 = vmatprep.subr.mxu0 0.0
    %1790 = vmatpush1.msra.mxu0 0.0
    %1791 = vmatprep.subr.mxu0 0.0
    %1792 = vmatpush1.msra.mxu0 0.0
    %1793 = vmatprep.subr.mxu0 0.0
    %1794 = vmatpush1.msra.mxu0 0.0
    %1795 = vmatprep.mubr.f32.mxu0 0.0
    %1796 = vmatmul.mubr.f32.gmra.mrb[0].mxu0 %v1516
    %v1797 = vpop.f32.mrb[0].mxu0
    %v1798 = vadd.f32 %v1513, %v1797
    %v1799 = vpop.f32.mrb[0].mxu0
    %v1800 = vadd.f32 %v1513, %v1799
    %1801 = vdwg.mxu0
    %v1810 = vcombine.low %v1585, %v1587
    %v1811 = vcombine.low %v1656, %v1658
    %v1812 = vcombine.low %v1727, %v1729
    %v1813 = vcombine.low %v1798, %v1800
    %1818 = vst [vmem:[#allocation2] sm:$0xff] %v1810
    %1819 = vst [vmem:[#allocation2 + $0x8] sm:$0xff] %v1811
    %1820 = vst [vmem:[#allocation2 + $0x10] sm:$0xff] %v1812
    %1821 = vst [vmem:[#allocation2 + $0x18] sm:$0xff] %v1813
    // Predicated region
    $region46: #{tpu_custom_call.1} parent=1 // pred_check
      _
    $region47: #{tpu_custom_call.1} parent=1 // pred_check_branch
      %1823 = sbr.rel (0) target = $region49
    $region48: #{tpu_custom_call.1} parent=1 // pred_region
      %s1825 = ssub.s32 512, 512
      %1826 = vsyncadd [#allocation3], %s1825
      %s1828 = sshll.u32 [#allocation2], 4
      %s1829 = int_to_ptr.vmem [resolvable:$true] %s1828
      %1831 = dma.vmem_to_hbm [thread:$0]  %s1829, 512, %s11, [#allocation3]
    $region49: #{tpu_custom_call.1} parent=1 // pred_fallthru
      _
    // Predicated region
    $region50: #{tpu_custom_call.1} parent=1 // pred_check
      _
    $region51: #{tpu_custom_call.1} parent=1 // pred_check_branch
      %1833 = sbr.rel (0) target = $region53
    $region52: #{tpu_custom_call.1} parent=1 // pred_region
      %1834 = dma.done [#allocation3], 512
    $region53: #{tpu_custom_call.1} parent=1 // pred_fallthru
      _
    %1835 = vsyncpa [#allocation3], 1

</llo_original>
